<compile_context>
chip_gen: v7x
topology: tpu7x:2x2x1
jax: 0.10.0
libtpu: 0.0.40
codegen_flags: <defaults>
</compile_context>

<pallas_src>
import jax
import jax.numpy as jnp
import numpy as np
from jax.experimental import pallas as pl
from jax.experimental.pallas import tpu as pltpu

KT = 3          # STGCN uses self.kernel_size = 3 for both temporal conv layers
LANE = 128      # TPU lane width (last-dim tile)
SUBLANE = 8     # TPU sublane width (second-to-last dim tile, f32)


def _round_up(v, m):
    return ((v + m - 1) // m) * m


# ---------------------------------------------------------------------------
# Fused Pallas kernel: entire STGCN forward in one pallas_call
# ---------------------------------------------------------------------------
def _make_stgcn_kernel(splits):
    """splits: per-block (glu1_half_width, glu2_half_width) static lane splits.

    Each half width is a multiple of 128 so the P/Q split below is a free view.
    Ref order: [a_hat, x, (6 packed tensors per block)..., PA, w_out, b_out, o].
    """

    def kernel(*refs):
        a_ref, x_ref = refs[0], refs[1]
        o_ref = refs[-1]
        x = x_ref[...]                                   # [N_pad, W0_pad] f32

        def glu(x, w_pq_ref, b_pq_ref, half):
            # Fused GLU: one MXU dot produces [P | Q]; split at 128-aligned `half`.
            pq = jnp.dot(x.astype(jnp.bfloat16), w_pq_ref[...],
                         preferred_element_type=jnp.float32) + b_pq_ref[...]
            return pq[:, :half] * jax.nn.sigmoid(pq[:, half:])

        idx = 2
        for (half1, half2) in splits:
            w_pq1, b_pq1, wg, bg, w_pq2, b_pq2 = refs[idx:idx + 6]
            idx += 6
            # TemporalConvLayer #1 (causal conv with Align folded in + GLU)
            x = glu(x, w_pq1, b_pq1, half1)
            # Per-timestep GCNConv + ReLU, batched over time via block-diag weight.
            h = jnp.dot(x.astype(jnp.bfloat16), wg[...],
                        preferred_element_type=jnp.float32)
            # Re-read A_hat at each use instead of holding it live across blocks.
            h = jnp.dot(a_ref[...], h.astype(jnp.bfloat16),
                        preferred_element_type=jnp.float32) + bg[...]
            x = jnp.maximum(h, 0.0)
            # TemporalConvLayer #2
            x = glu(x, w_pq2, b_pq2, half2)
            # TODO(synk): nn.Dropout implemented as identity (eval-mode forward).

        # Outlayer GCNConv + mean pool. pool @ A_hat is pre-folded into PA, and
        # the (channel, time) flatten is folded into a row-permuted w_out.
        pa_ref, w_out_ref, b_out_ref = refs[idx], refs[idx + 1], refs[idx + 2]
        h = jnp.dot(x.astype(jnp.bfloat16), w_out_ref[...],
                    preferred_element_type=jnp.float32)
        o_ref[...] = jnp.dot(pa_ref[...], h.astype(jnp.bfloat16),
                             preferred_element_type=jnp.float32) + b_out_ref[...]

    return kernel


def stgcn_forward(x_nodes, a_hat, pool, kparams):
    """x_nodes: [N, T0] node time series, a_hat: [N, N], pool: [G, N] -> [G, out_dim]."""
    n, t0 = x_nodes.shape
    g = pool.shape[0]
    n_pad = _round_up(n, SUBLANE)
    g_pad = _round_up(g, SUBLANE)
    t0_pad = _round_up(t0, LANE)
    out_dim = kparams["out_dim"]
    out_pad = kparams["bout"].shape[1]

    # Zero-pad to hardware tiles. Padded rows/cols of A_hat / pool are exactly
    # zero, so padded-node junk never leaks into real nodes or the mean pool.
    x_p = jnp.zeros((n_pad, t0_pad), jnp.float32).at[:n, :t0].set(x_nodes)
    a_p = jnp.zeros((n_pad, n_pad), jnp.float32).at[:n, :n].set(a_hat)
    pa = pool @ a_hat                    # fold mean-pool into the outlayer aggregation
    pa_p = jnp.zeros((g_pad, n_pad), jnp.float32).at[:g, :n].set(pa)

    args = [a_p.astype(jnp.bfloat16), x_p]
    for blk in kparams["blocks"]:
        args.extend(blk)
    args += [pa_p.astype(jnp.bfloat16), kparams["wout"], kparams["bout"]]

    out = pl.pallas_call(
        _make_stgcn_kernel(kparams["splits"]),
        in_specs=[pl.BlockSpec(memory_space=pltpu.MemorySpace.VMEM) for _ in args],
        out_specs=pl.BlockSpec(memory_space=pltpu.MemorySpace.VMEM),
        out_shape=jax.ShapeDtypeStruct((g_pad, out_pad), jnp.float32),
        compiler_params=pltpu.CompilerParams(vmem_limit_bytes=32 * 1024 * 1024),
    )(*args)
    return out[:g, :out_dim]


# ---------------------------------------------------------------------------
# Deterministic parameter construction (mirrors the module's __init__ shapes)
# ---------------------------------------------------------------------------
def _align_params(key, c_in, c_out):
    if c_in > c_out:                      # Align uses a 1x1 Conv2d(c_in -> c_out)
        kw, kb = jax.random.split(key)
        wa = jax.random.normal(kw, (c_in, c_out), jnp.float32) * 0.3
        ba = jax.random.normal(kb, (1, c_out), jnp.float32) * 0.1
    elif c_in < c_out:                    # zero-pad extra channels
        wa = jnp.concatenate(
            [jnp.eye(c_in, dtype=jnp.float32),
             jnp.zeros((c_in, c_out - c_in), jnp.float32)], axis=1)
        ba = jnp.zeros((1, c_out), jnp.float32)
    else:                                 # identity
        wa = jnp.eye(c_in, dtype=jnp.float32)
        ba = jnp.zeros((1, c_out), jnp.float32)
    return wa, ba


def _temporal_layer_params(key, kt, c_in, c_out):
    kc, kb, ka = jax.random.split(key, 3)
    wa, ba = _align_params(ka, c_in, c_out)
    return {
        "wc": jax.random.normal(kc, (kt, c_in, 2 * c_out), jnp.float32) * 0.3,
        "bc": jax.random.normal(kb, (1, 2 * c_out), jnp.float32) * 0.1,
        "wa": wa,
        "ba": ba,
    }


def _gcn_params(key, c_in, c_out):
    kw, kb = jax.random.split(key)
    return {"w": jax.random.normal(kw, (c_in, c_out), jnp.float32) * 0.3,
            "b": jax.random.normal(kb, (1, c_out), jnp.float32) * 0.1}


def init_stgcn_params(key, n_layers, in_dim, out_dim):
    params = {"blocks": []}
    last_block_channel = 1
    channel = [1, 2, 4]
    for _ in range(n_layers):
        key, k1, k2, k3 = jax.random.split(key, 4)
        params["blocks"].append({
            "tc1": _temporal_layer_params(k1, KT, last_block_channel, channel[0]),
            "gcn": _gcn_params(k2, channel[0], channel[1]),
            "tc2": _temporal_layer_params(k3, KT, channel[1], channel[2]),
        })
        last_block_channel = channel[-1]
        channel = [2 * c for c in channel]
    ts_final = in_dim - 2 * KT * n_layers + 2 * n_layers
    key, ko = jax.random.split(key)
    params["out"] = _gcn_params(ko, last_block_channel * ts_final, out_dim)
    return params


# ---------------------------------------------------------------------------
# Packing: fold temporal structure into tile-padded bf16 weights (host, once)
# TODO(synk): for large T, replace the O(T^2) banded/dense matmuls with Kt
#             shifted views of x (O(Kt*T) FLOPs/VMEM) before growing in_dim.
# ---------------------------------------------------------------------------
def _conv_band(wc_half, t_in):
    """Banded matrix for a VALID causal conv with kernel (Kt,1).
    M[(t+k)*C_in + ci, t*C_out + co] = wc_half[k, ci, co]."""
    kt, c_in, c_out = wc_half.shape
    t_out = t_in - kt + 1
    m = np.zeros((t_in * c_in, t_out * c_out), np.float32)
    for t in range(t_out):
        for k in range(kt):
            m[(t + k) * c_in:(t + k + 1) * c_in,
              t * c_out:(t + 1) * c_out] = wc_half[k]
    return m


def _align_band(wa, t_in, kt):
    """Align (1x1 conv) applied at time t+Kt-1, emitted at output slot t."""
    c_in, c_out = wa.shape
    t_out = t_in - kt + 1
    m = np.zeros((t_in * c_in, t_out * c_out), np.float32)
    for t in range(t_out):
        ti = t + kt - 1
        m[ti * c_in:(ti + 1) * c_in, t * c_out:(t + 1) * c_out] = wa
    return m


def _block_diag(w, reps):
    c_in, c_out = w.shape
    m = np.zeros((reps * c_in, reps * c_out), np.float32)
    for i in range(reps):
        m[i * c_in:(i + 1) * c_in, i * c_out:(i + 1) * c_out] = w
    return m


def _pad2(m, rows, cols):
    out = np.zeros((rows, cols), np.float32)
    out[:m.shape[0], :m.shape[1]] = m
    return out


def _pack_temporal(p, t_in):
    """Pack one TemporalConvLayer into a fused, lane-padded [P|Q] weight."""
    wc = np.asarray(p["wc"], np.float32)
    bc = np.asarray(p["bc"], np.float32)
    wa = np.asarray(p["wa"], np.float32)
    ba = np.asarray(p["ba"], np.float32)
    kt, c_in, two_c = wc.shape
    c_out = two_c // 2
    t_out = t_in - kt + 1
    w_in, w_out = t_in * c_in, t_out * c_out
    # conv "P" half + Align are both linear in x -> fold into one matrix.
    wpa = _conv_band(wc[:, :, :c_out], t_in) + _align_band(wa, t_in, kt)
    wq = _conv_band(wc[:, :, c_out:], t_in)
    bpa = np.tile(bc[:, :c_out], (1, t_out)) + np.tile(ba, (1, t_out))
    bq = np.tile(bc[:, c_out:], (1, t_out))
    w_in_pad = _round_up(w_in, LANE)
    half_pad = _round_up(w_out, LANE)
    w_pq = np.concatenate([_pad2(wpa, w_in_pad, half_pad),
                           _pad2(wq, w_in_pad, half_pad)], axis=1)
    b_pq = np.concatenate([_pad2(bpa, 1, half_pad),
                           _pad2(bq, 1, half_pad)], axis=1)
    return (jnp.asarray(w_pq, jnp.bfloat16),
            jnp.asarray(b_pq, jnp.float32),
            half_pad, t_out, c_out)


def pack_kernel_params(params, in_dim, out_dim):
    """Convert reference-style params into tile-padded bf16 matrices for the kernel."""
    blocks, splits = [], []
    t = in_dim
    c_last = 1
    for blk in params["blocks"]:
        w_pq1, b_pq1, s1, t, c1 = _pack_temporal(blk["tc1"], t)
        gw = np.asarray(blk["gcn"]["w"], np.float32)
        gb = np.asarray(blk["gcn"]["b"], np.float32)
        c2 = gw.shape[1]
        wg = _pad2(_block_diag(gw, t), _round_up(t * c1, LANE), _round_up(t * c2, LANE))
        bg = _pad2(np.tile(gb, (1, t)), 1, _round_up(t * c2, LANE))
        w_pq2, b_pq2, s2, t, c_last = _pack_temporal(blk["tc2"], t)
        blocks.append((w_pq1, b_pq1,
                       jnp.asarray(wg, jnp.bfloat16), jnp.asarray(bg, jnp.float32),
                       w_pq2, b_pq2))
        splits.append((s1, s2))
    # Fold the (channel, time) flatten into a row permutation of the outlayer
    # weight: kernel columns are ordered (t, c); the reference flattens as (c, t).
    w = np.asarray(params["out"]["w"], np.float32)
    cols = np.arange(t * c_last)
    perm = (cols % c_last) * t + (cols // c_last)
    w_perm = w[perm]
    w_out = _pad2(w_perm, _round_up(t * c_last, LANE), _round_up(out_dim, LANE))
    b_out = _pad2(np.asarray(params["out"]["b"], np.float32), 1, _round_up(out_dim, LANE))
    return {"blocks": blocks, "splits": splits,
            "wout": jnp.asarray(w_out, jnp.bfloat16),
            "bout": jnp.asarray(b_out, jnp.float32),
            "out_dim": out_dim}


# ---------------------------------------------------------------------------
# Graph glue (dense normalized adjacency / mean-pool matrix)
# ---------------------------------------------------------------------------
def build_gcn_adjacency(edge_index, num_nodes):
    """Dense A_hat = D^-1/2 (A + I) D^-1/2 with message flow src->dst (PyG GCNConv)."""
    row = edge_index[0]
    col = edge_index[1]
    loops = jnp.arange(num_nodes, dtype=edge_index.dtype)
    row = jnp.concatenate([row, loops])
    col = jnp.concatenate([col, loops])
    deg = jnp.zeros((num_nodes,), jnp.float32).at[col].add(1.0)
    dinv = jnp.where(deg > 0, jax.lax.rsqrt(deg), 0.0)
    norm = dinv[row] * dinv[col]
    return jnp.zeros((num_nodes, num_nodes), jnp.float32).at[col, row].add(norm)


def build_mean_pool_matrix(batch, num_graphs):
    onehot = (batch[None, :] == jnp.arange(num_graphs)[:, None]).astype(jnp.float32)
    counts = onehot.sum(axis=1, keepdims=True)
    return onehot / jnp.maximum(counts, 1.0)


# ---------------------------------------------------------------------------
# Pure-JAX f32 reference (mirrors the PyTorch module) for correctness checking
# ---------------------------------------------------------------------------
def _temporal_glu_ref(x, p):
    kt = p["wc"].shape[0]
    c_out = p["wc"].shape[2] // 2
    x_nchw = jnp.transpose(x, (2, 0, 1))[None]                     # [1, C_in, T, N]
    w_oihw = jnp.transpose(p["wc"], (2, 1, 0))[:, :, :, None]      # [2C_out, C_in, Kt, 1]
    conv = jax.lax.conv_general_dilated(
        x_nchw, w_oihw, (1, 1), "VALID",
        dimension_numbers=("NCHW", "OIHW", "NCHW"))
    conv = jnp.transpose(conv[0], (1, 2, 0)) + p["bc"][0]          # [T_out, N, 2C_out]
    x_in = x[kt - 1:] @ p["wa"] + p["ba"][0]
    return (conv[..., :c_out] + x_in) * jax.nn.sigmoid(conv[..., c_out:])


def _gcn_relu_ref(a, x, p):
    h = jnp.einsum("mn,tnc->tmc", a, x @ p["w"]) + p["b"][0]
    return jnp.maximum(h, 0.0)


def _gcn_pool_ref(a, x, pool, p):
    return pool @ (a @ (x @ p["w"]) + p["b"][0])


def stgcn_ref(x_nodes, a_hat, pool, params):
    x = jnp.transpose(x_nodes)[:, :, None]                         # [T0, N, 1]
    for blk in params["blocks"]:
        x = _temporal_glu_ref(x, blk["tc1"])
        x = _gcn_relu_ref(a_hat, x, blk["gcn"])
        x = _temporal_glu_ref(x, blk["tc2"])
    feats = jnp.transpose(x, (1, 2, 0)).reshape(x.shape[1], -1)    # [N, C*T]
    return _gcn_pool_ref(a_hat, feats, pool, params["out"])


# ---------------------------------------------------------------------------
if __name__ == "__main__":
    key = jax.random.PRNGKey(0)

    n_layers = 2
    in_dim = 16            # per-node time-series length (data.x: [N, in_dim])
    out_dim = 8
    nodes_per_graph = 6
    num_graphs = 2
    num_nodes = nodes_per_graph * num_graphs

    # simple ring graph inside each component, both edge directions
    src, dst = [], []
    for g in range(num_graphs):
        off = g * nodes_per_graph
        for i in range(nodes_per_graph):
            j = (i + 1) % nodes_per_graph
            src += [off + i, off + j]
            dst += [off + j, off + i]
    edge_index = jnp.array([src, dst], dtype=jnp.int32)
    batch = jnp.array(sum([[g] * nodes_per_graph for g in range(num_graphs)], []),
                      dtype=jnp.int32)

    k_x, k_p = jax.random.split(key)
    x_nodes = jax.random.normal(k_x, (num_nodes, in_dim), jnp.float32)
    params = init_stgcn_params(k_p, n_layers, in_dim, out_dim)

    a_hat = build_gcn_adjacency(edge_index, num_nodes)
    pool = build_mean_pool_matrix(batch, num_graphs)   # readout_type = 'mean'

    kparams = pack_kernel_params(params, in_dim, out_dim)   # one-time weight packing

    out = stgcn_forward(x_nodes, a_hat, pool, kparams)
    out = jax.block_until_ready(out)

    # Reference is f32 end-to-end; the kernel feeds bf16 operands to the MXU
    # (f32 accumulate), so tolerance is loosened from 1e-3 accordingly.
    ref = stgcn_ref(x_nodes, a_hat, pool, params)
    np.testing.assert_allclose(np.asarray(out), np.asarray(ref), rtol=5e-2, atol=5e-2)
    assert out.shape == (num_graphs, out_dim)
    print("KERNEL_OK")
</pallas_src>

<mosaic_0001>
module attributes {stable_mosaic.version = 11 : i64} {
  func.func @kernel(%arg0: memref<16x16xbf16, #tpu.memory_space<vmem>>, %arg1: memref<16x128xf32, #tpu.memory_space<vmem>>, %arg2: memref<128x256xbf16, #tpu.memory_space<vmem>>, %arg3: memref<1x256xf32, #tpu.memory_space<vmem>>, %arg4: memref<128x128xbf16, #tpu.memory_space<vmem>>, %arg5: memref<1x128xf32, #tpu.memory_space<vmem>>, %arg6: memref<128x256xbf16, #tpu.memory_space<vmem>>, %arg7: memref<1x256xf32, #tpu.memory_space<vmem>>, %arg8: memref<128x256xbf16, #tpu.memory_space<vmem>>, %arg9: memref<1x256xf32, #tpu.memory_space<vmem>>, %arg10: memref<128x128xbf16, #tpu.memory_space<vmem>>, %arg11: memref<1x128xf32, #tpu.memory_space<vmem>>, %arg12: memref<128x256xbf16, #tpu.memory_space<vmem>>, %arg13: memref<1x256xf32, #tpu.memory_space<vmem>>, %arg14: memref<8x16xbf16, #tpu.memory_space<vmem>>, %arg15: memref<128x128xbf16, #tpu.memory_space<vmem>>, %arg16: memref<1x128xf32, #tpu.memory_space<vmem>>, %arg17: memref<8x128xf32, #tpu.memory_space<vmem>>) attributes {dimension_semantics = [], scalar_prefetch = 0 : i64, scratch_operands = 0 : i64, tpu.core_type = #tpu.core_type<tc>} {
    %c0 = arith.constant 0 : index
    %c0_0 = arith.constant 0 : index
    %0 = vector.load %arg1[%c0, %c0_0] : memref<16x128xf32, #tpu.memory_space<vmem>>, vector<16x128xf32>
    %1 = arith.truncf %0 : vector<16x128xf32> to vector<16x128xbf16>
    %c0_1 = arith.constant 0 : index
    %c0_2 = arith.constant 0 : index
    %2 = vector.load %arg2[%c0_1, %c0_2] : memref<128x256xbf16, #tpu.memory_space<vmem>>, vector<128x256xbf16>
    %cst = arith.constant dense<0.000000e+00> : vector<16x256xf32>
    %3 = tpu.matmul %1, %2, %cst {dimension_numbers = #tpu.dot_dimension_numbers<[1], [0], [0], [1], [0, 0, 1, 1], [], []>} : vector<16x128xbf16>, vector<128x256xbf16>, vector<16x256xf32> -> vector<16x256xf32>
    %c0_3 = arith.constant 0 : index
    %c0_4 = arith.constant 0 : index
    %4 = vector.load %arg3[%c0_3, %c0_4] : memref<1x256xf32, #tpu.memory_space<vmem>>, vector<1x256xf32>
    %5 = vector.broadcast %4 : vector<1x256xf32> to vector<16x256xf32>
    %6 = arith.addf %3, %5 : vector<16x256xf32>
    %7 = vector.extract_strided_slice %6 {offsets = [0, 0], sizes = [16, 128], strides = [1, 1]} : vector<16x256xf32> to vector<16x128xf32>
    %8 = vector.extract_strided_slice %6 {offsets = [0, 128], sizes = [16, 128], strides = [1, 1]} : vector<16x256xf32> to vector<16x128xf32>
    %9 = arith.negf %8 : vector<16x128xf32>
    %10 = math.exp %9 : vector<16x128xf32>
    %cst_5 = arith.constant 1.000000e+00 : f32
    %11 = vector.broadcast %cst_5 : f32 to vector<16x128xf32>
    %12 = arith.addf %11, %10 : vector<16x128xf32>
    %13 = arith.divf %11, %12 : vector<16x128xf32>
    %14 = arith.mulf %7, %13 : vector<16x128xf32>
    %15 = arith.truncf %14 : vector<16x128xf32> to vector<16x128xbf16>
    %c0_6 = arith.constant 0 : index
    %c0_7 = arith.constant 0 : index
    %16 = vector.load %arg4[%c0_6, %c0_7] : memref<128x128xbf16, #tpu.memory_space<vmem>>, vector<128x128xbf16>
    %cst_8 = arith.constant dense<0.000000e+00> : vector<16x128xf32>
    %17 = tpu.matmul %15, %16, %cst_8 {dimension_numbers = #tpu.dot_dimension_numbers<[1], [0], [0], [1], [0, 0, 1, 1], [], []>} : vector<16x128xbf16>, vector<128x128xbf16>, vector<16x128xf32> -> vector<16x128xf32>
    %c0_9 = arith.constant 0 : index
    %c0_10 = arith.constant 0 : index
    %18 = vector.load %arg0[%c0_9, %c0_10] : memref<16x16xbf16, #tpu.memory_space<vmem>>, vector<16x16xbf16>
    %19 = arith.truncf %17 : vector<16x128xf32> to vector<16x128xbf16>
    %cst_11 = arith.constant dense<0.000000e+00> : vector<16x128xf32>
    %20 = tpu.matmul %18, %19, %cst_11 {dimension_numbers = #tpu.dot_dimension_numbers<[1], [0], [0], [1], [0, 0, 1, 1], [], []>} : vector<16x16xbf16>, vector<16x128xbf16>, vector<16x128xf32> -> vector<16x128xf32>
    %c0_12 = arith.constant 0 : index
    %c0_13 = arith.constant 0 : index
    %21 = vector.load %arg5[%c0_12, %c0_13] : memref<1x128xf32, #tpu.memory_space<vmem>>, vector<1x128xf32>
    %22 = vector.broadcast %21 : vector<1x128xf32> to vector<16x128xf32>
    %23 = arith.addf %20, %22 : vector<16x128xf32>
    %cst_14 = arith.constant 0.000000e+00 : f32
    %24 = vector.broadcast %cst_14 : f32 to vector<16x128xf32>
    %25 = arith.maximumf %23, %24 : vector<16x128xf32>
    %26 = arith.truncf %25 : vector<16x128xf32> to vector<16x128xbf16>
    %c0_15 = arith.constant 0 : index
    %c0_16 = arith.constant 0 : index
    %27 = vector.load %arg6[%c0_15, %c0_16] : memref<128x256xbf16, #tpu.memory_space<vmem>>, vector<128x256xbf16>
    %cst_17 = arith.constant dense<0.000000e+00> : vector<16x256xf32>
    %28 = tpu.matmul %26, %27, %cst_17 {dimension_numbers = #tpu.dot_dimension_numbers<[1], [0], [0], [1], [0, 0, 1, 1], [], []>} : vector<16x128xbf16>, vector<128x256xbf16>, vector<16x256xf32> -> vector<16x256xf32>
    %c0_18 = arith.constant 0 : index
    %c0_19 = arith.constant 0 : index
    %29 = vector.load %arg7[%c0_18, %c0_19] : memref<1x256xf32, #tpu.memory_space<vmem>>, vector<1x256xf32>
    %30 = vector.broadcast %29 : vector<1x256xf32> to vector<16x256xf32>
    %31 = arith.addf %28, %30 : vector<16x256xf32>
    %32 = vector.extract_strided_slice %31 {offsets = [0, 0], sizes = [16, 128], strides = [1, 1]} : vector<16x256xf32> to vector<16x128xf32>
    %33 = vector.extract_strided_slice %31 {offsets = [0, 128], sizes = [16, 128], strides = [1, 1]} : vector<16x256xf32> to vector<16x128xf32>
    %34 = arith.negf %33 : vector<16x128xf32>
    %35 = math.exp %34 : vector<16x128xf32>
    %cst_20 = arith.constant 1.000000e+00 : f32
    %36 = vector.broadcast %cst_20 : f32 to vector<16x128xf32>
    %37 = arith.addf %36, %35 : vector<16x128xf32>
    %38 = arith.divf %36, %37 : vector<16x128xf32>
    %39 = arith.mulf %32, %38 : vector<16x128xf32>
    %40 = arith.truncf %39 : vector<16x128xf32> to vector<16x128xbf16>
    %c0_21 = arith.constant 0 : index
    %c0_22 = arith.constant 0 : index
    %41 = vector.load %arg8[%c0_21, %c0_22] : memref<128x256xbf16, #tpu.memory_space<vmem>>, vector<128x256xbf16>
    %cst_23 = arith.constant dense<0.000000e+00> : vector<16x256xf32>
    %42 = tpu.matmul %40, %41, %cst_23 {dimension_numbers = #tpu.dot_dimension_numbers<[1], [0], [0], [1], [0, 0, 1, 1], [], []>} : vector<16x128xbf16>, vector<128x256xbf16>, vector<16x256xf32> -> vector<16x256xf32>
    %c0_24 = arith.constant 0 : index
    %c0_25 = arith.constant 0 : index
    %43 = vector.load %arg9[%c0_24, %c0_25] : memref<1x256xf32, #tpu.memory_space<vmem>>, vector<1x256xf32>
    %44 = vector.broadcast %43 : vector<1x256xf32> to vector<16x256xf32>
    %45 = arith.addf %42, %44 : vector<16x256xf32>
    %46 = vector.extract_strided_slice %45 {offsets = [0, 0], sizes = [16, 128], strides = [1, 1]} : vector<16x256xf32> to vector<16x128xf32>
    %47 = vector.extract_strided_slice %45 {offsets = [0, 128], sizes = [16, 128], strides = [1, 1]} : vector<16x256xf32> to vector<16x128xf32>
    %48 = arith.negf %47 : vector<16x128xf32>
    %49 = math.exp %48 : vector<16x128xf32>
    %cst_26 = arith.constant 1.000000e+00 : f32
    %50 = vector.broadcast %cst_26 : f32 to vector<16x128xf32>
    %51 = arith.addf %50, %49 : vector<16x128xf32>
    %52 = arith.divf %50, %51 : vector<16x128xf32>
    %53 = arith.mulf %46, %52 : vector<16x128xf32>
    %54 = arith.truncf %53 : vector<16x128xf32> to vector<16x128xbf16>
    %c0_27 = arith.constant 0 : index
    %c0_28 = arith.constant 0 : index
    %55 = vector.load %arg10[%c0_27, %c0_28] : memref<128x128xbf16, #tpu.memory_space<vmem>>, vector<128x128xbf16>
    %cst_29 = arith.constant dense<0.000000e+00> : vector<16x128xf32>
    %56 = tpu.matmul %54, %55, %cst_29 {dimension_numbers = #tpu.dot_dimension_numbers<[1], [0], [0], [1], [0, 0, 1, 1], [], []>} : vector<16x128xbf16>, vector<128x128xbf16>, vector<16x128xf32> -> vector<16x128xf32>
    %c0_30 = arith.constant 0 : index
    %c0_31 = arith.constant 0 : index
    %57 = vector.load %arg0[%c0_30, %c0_31] : memref<16x16xbf16, #tpu.memory_space<vmem>>, vector<16x16xbf16>
    %58 = arith.truncf %56 : vector<16x128xf32> to vector<16x128xbf16>
    %cst_32 = arith.constant dense<0.000000e+00> : vector<16x128xf32>
    %59 = tpu.matmul %57, %58, %cst_32 {dimension_numbers = #tpu.dot_dimension_numbers<[1], [0], [0], [1], [0, 0, 1, 1], [], []>} : vector<16x16xbf16>, vector<16x128xbf16>, vector<16x128xf32> -> vector<16x128xf32>
    %c0_33 = arith.constant 0 : index
    %c0_34 = arith.constant 0 : index
    %60 = vector.load %arg11[%c0_33, %c0_34] : memref<1x128xf32, #tpu.memory_space<vmem>>, vector<1x128xf32>
    %61 = vector.broadcast %60 : vector<1x128xf32> to vector<16x128xf32>
    %62 = arith.addf %59, %61 : vector<16x128xf32>
    %cst_35 = arith.constant 0.000000e+00 : f32
    %63 = vector.broadcast %cst_35 : f32 to vector<16x128xf32>
    %64 = arith.maximumf %62, %63 : vector<16x128xf32>
    %65 = arith.truncf %64 : vector<16x128xf32> to vector<16x128xbf16>
    %c0_36 = arith.constant 0 : index
    %c0_37 = arith.constant 0 : index
    %66 = vector.load %arg12[%c0_36, %c0_37] : memref<128x256xbf16, #tpu.memory_space<vmem>>, vector<128x256xbf16>
    %cst_38 = arith.constant dense<0.000000e+00> : vector<16x256xf32>
    %67 = tpu.matmul %65, %66, %cst_38 {dimension_numbers = #tpu.dot_dimension_numbers<[1], [0], [0], [1], [0, 0, 1, 1], [], []>} : vector<16x128xbf16>, vector<128x256xbf16>, vector<16x256xf32> -> vector<16x256xf32>
    %c0_39 = arith.constant 0 : index
    %c0_40 = arith.constant 0 : index
    %68 = vector.load %arg13[%c0_39, %c0_40] : memref<1x256xf32, #tpu.memory_space<vmem>>, vector<1x256xf32>
    %69 = vector.broadcast %68 : vector<1x256xf32> to vector<16x256xf32>
    %70 = arith.addf %67, %69 : vector<16x256xf32>
    %71 = vector.extract_strided_slice %70 {offsets = [0, 0], sizes = [16, 128], strides = [1, 1]} : vector<16x256xf32> to vector<16x128xf32>
    %72 = vector.extract_strided_slice %70 {offsets = [0, 128], sizes = [16, 128], strides = [1, 1]} : vector<16x256xf32> to vector<16x128xf32>
    %73 = arith.negf %72 : vector<16x128xf32>
    %74 = math.exp %73 : vector<16x128xf32>
    %cst_41 = arith.constant 1.000000e+00 : f32
    %75 = vector.broadcast %cst_41 : f32 to vector<16x128xf32>
    %76 = arith.addf %75, %74 : vector<16x128xf32>
    %77 = arith.divf %75, %76 : vector<16x128xf32>
    %78 = arith.mulf %71, %77 : vector<16x128xf32>
    %79 = arith.truncf %78 : vector<16x128xf32> to vector<16x128xbf16>
    %c0_42 = arith.constant 0 : index
    %c0_43 = arith.constant 0 : index
    %80 = vector.load %arg15[%c0_42, %c0_43] : memref<128x128xbf16, #tpu.memory_space<vmem>>, vector<128x128xbf16>
    %cst_44 = arith.constant dense<0.000000e+00> : vector<16x128xf32>
    %81 = tpu.matmul %79, %80, %cst_44 {dimension_numbers = #tpu.dot_dimension_numbers<[1], [0], [0], [1], [0, 0, 1, 1], [], []>} : vector<16x128xbf16>, vector<128x128xbf16>, vector<16x128xf32> -> vector<16x128xf32>
    %c0_45 = arith.constant 0 : index
    %c0_46 = arith.constant 0 : index
    %82 = vector.load %arg14[%c0_45, %c0_46] : memref<8x16xbf16, #tpu.memory_space<vmem>>, vector<8x16xbf16>
    %83 = arith.truncf %81 : vector<16x128xf32> to vector<16x128xbf16>
    %cst_47 = arith.constant dense<0.000000e+00> : vector<8x128xf32>
    %84 = tpu.matmul %82, %83, %cst_47 {dimension_numbers = #tpu.dot_dimension_numbers<[1], [0], [0], [1], [0, 0, 1, 1], [], []>} : vector<8x16xbf16>, vector<16x128xbf16>, vector<8x128xf32> -> vector<8x128xf32>
    %c0_48 = arith.constant 0 : index
    %c0_49 = arith.constant 0 : index
    %85 = vector.load %arg16[%c0_48, %c0_49] : memref<1x128xf32, #tpu.memory_space<vmem>>, vector<1x128xf32>
    %86 = vector.broadcast %85 : vector<1x128xf32> to vector<8x128xf32>
    %87 = arith.addf %84, %86 : vector<8x128xf32>
    %c0_50 = arith.constant 0 : index
    %c0_51 = arith.constant 0 : index
    %88 = vector.load %arg17[%c0_50, %c0_51] : memref<8x128xf32, #tpu.memory_space<vmem>>, vector<8x128xf32>
    tpu.vector_store %arg17[%c0_50, %c0_51], %87 {strides = array<i32>} : memref<8x128xf32, #tpu.memory_space<vmem>>, vector<8x128xf32>,
    return
  }
}

</mosaic_0001>

<llo_original>
// kernel: tpu_custom_call.1
$region0: #{tpu_custom_call.1}
  #allocation0 [shape = 'u32[]', space=smem, size = 0x4, offset = 0x4, fixed_abs, tag = 'smem constant byte address 0x4 - core index']
  #allocation1 [shape = 'u32[144,128]{1,0:T(1,128)}', space=vmem, size = 0x12000, scoped, tag = 'internal scratch']
  %s0 = inlined_call_operand.hbm [shape: bf16[16,16], index: 0, kind: input, shape index: {}]
  %s1 = inlined_call_operand.hbm [shape: f32[16,128], index: 1, kind: input, shape index: {}]
  %s2 = inlined_call_operand.hbm [shape: bf16[128,256], index: 2, kind: input, shape index: {}]
  %s3 = inlined_call_operand.vmem [shape: f32[1,256], index: 3, kind: input, shape index: {}]
  %s4 = inlined_call_operand.hbm [shape: bf16[128,128], index: 4, kind: input, shape index: {}]
  %s5 = inlined_call_operand.vmem [shape: f32[1,128], index: 5, kind: input, shape index: {}]
  %s6 = inlined_call_operand.hbm [shape: bf16[128,256], index: 6, kind: input, shape index: {}]
  %s7 = inlined_call_operand.vmem [shape: f32[1,256], index: 7, kind: input, shape index: {}]
  %s8 = inlined_call_operand.hbm [shape: bf16[128,256], index: 8, kind: input, shape index: {}]
  %s9 = inlined_call_operand.vmem [shape: f32[1,256], index: 9, kind: input, shape index: {}]
  %s10 = inlined_call_operand.hbm [shape: bf16[128,128], index: 10, kind: input, shape index: {}]
  %s11 = inlined_call_operand.vmem [shape: f32[1,128], index: 11, kind: input, shape index: {}]
  %s12 = inlined_call_operand.hbm [shape: bf16[128,256], index: 12, kind: input, shape index: {}]
  %s13 = inlined_call_operand.vmem [shape: f32[1,256], index: 13, kind: input, shape index: {}]
  %s14 = inlined_call_operand.vmem [shape: bf16[8,16], index: 14, kind: input, shape index: {}]
  %s15 = inlined_call_operand.hbm [shape: bf16[128,128], index: 15, kind: input, shape index: {}]
  %s16 = inlined_call_operand.vmem [shape: f32[1,128], index: 16, kind: input, shape index: {}]
  %s17 = inlined_call_operand.hbm [shape: f32[8,128], index: 17, kind: output, shape index: {}]
  %s18 = sld [smem:[#allocation0]]
  $region114: #{tpu_custom_call.1} parent=0
    _
  %s20 = ssub.s32 1, %s18
  %s21 = scalar_select 0, %s20, %s18
  $region1: #{tpu_custom_call.1} parent=0
    #allocation2 [shape = 'u8[4096]{0}', space=vmem, size = 0x1000, scoped, tag = 'input window, operand 0, single buffered']
    #allocation3 [shape = 's32[1]{0}', space=sflag, size = 0x4, scoped, tag = 'scoped memory for tpu_custom_call.1']
    #allocation4 [shape = 's32[1]{0}', space=sflag, size = 0x4, scoped, tag = 'scoped memory for tpu_custom_call.1']
    #allocation5 [shape = 'u8[8192]{0}', space=vmem, size = 0x2000, scoped, tag = 'input window, operand 1, single buffered']
    #allocation6 [shape = 's32[1]{0}', space=sflag, size = 0x4, scoped, tag = 'scoped memory for tpu_custom_call.1']
    #allocation7 [shape = 'u8[65536]{0}', space=vmem, size = 0x10000, scoped, tag = 'input window, operand 2, single buffered']
    #allocation8 [shape = 'u8[32768]{0}', space=vmem, size = 0x8000, scoped, tag = 'input window, operand 4, single buffered']
    #allocation9 [shape = 's32[1]{0}', space=sflag, size = 0x4, scoped, tag = 'scoped memory for tpu_custom_call.1']
    #allocation10 [shape = 'u8[65536]{0}', space=vmem, size = 0x10000, scoped, tag = 'input window, operand 6, single buffered']
    #allocation11 [shape = 'u8[65536]{0}', space=vmem, size = 0x10000, scoped, tag = 'input window, operand 8, single buffered']
    #allocation12 [shape = 's32[1]{0}', space=sflag, size = 0x4, scoped, tag = 'scoped memory for tpu_custom_call.1']
    #allocation13 [shape = 'u8[32768]{0}', space=vmem, size = 0x8000, scoped, tag = 'input window, operand 10, single buffered']
    #allocation14 [shape = 'u8[65536]{0}', space=vmem, size = 0x10000, scoped, tag = 'input window, operand 12, single buffered']
    #allocation15 [shape = 's32[1]{0}', space=sflag, size = 0x4, scoped, tag = 'scoped memory for tpu_custom_call.1']
    #allocation16 [shape = 'u8[32768]{0}', space=vmem, size = 0x8000, scoped, tag = 'input window, operand 15, single buffered']
    #allocation17 [shape = 'u8[4096]{0}', space=vmem, size = 0x1000, scoped, tag = 'output window, operand 0, single buffered']
    %22 = vsyncpa [#allocation3], 0
    %23 = vsyncpa [#allocation6], 0
    %24 = vsyncpa [#allocation9], 0
    %25 = vsyncpa [#allocation12], 0
    %26 = vsyncpa [#allocation15], 0
    %27 = vsyncpa [#allocation4], 0
    // Predicated region
    $region2: #{tpu_custom_call.1} parent=1 // pred_check
      _
    $region3: #{tpu_custom_call.1} parent=1 // pred_check_branch
      %29 = sbr.rel (0) target = $region5
    $region4: #{tpu_custom_call.1} parent=1 // pred_region
      %s31 = ssub.s32 128, 128
      %32 = vsyncadd [#allocation3], %s31
      %s33 = sshll.u32 [#allocation2], 4
      %s34 = int_to_ptr.vmem [resolvable:$true] %s33
      %39 = dma.hbm_to_vmem [thread:$0]  %s0, 128, %s34, [#allocation3], 64, 64, 4
    $region5: #{tpu_custom_call.1} parent=1 // pred_fallthru
      _
    // Predicated region
    $region6: #{tpu_custom_call.1} parent=1 // pred_check
      _
    $region7: #{tpu_custom_call.1} parent=1 // pred_check_branch
      %41 = sbr.rel (0) target = $region9
    $region8: #{tpu_custom_call.1} parent=1 // pred_region
      %s43 = ssub.s32 256, 256
      %44 = vsyncadd [#allocation6], %s43
      %s45 = sshll.u32 [#allocation5], 4
      %s46 = int_to_ptr.vmem [resolvable:$true] %s45
      %51 = dma.hbm_to_vmem [thread:$0]  %s1, 256, %s46, [#allocation6], 128, 128, 8
    $region9: #{tpu_custom_call.1} parent=1 // pred_fallthru
      _
    // Predicated region
    $region10: #{tpu_custom_call.1} parent=1 // pred_check
      _
    $region11: #{tpu_custom_call.1} parent=1 // pred_check_branch
      %53 = sbr.rel (0) target = $region13
    $region12: #{tpu_custom_call.1} parent=1 // pred_region
      %s55 = ssub.s32 2048, 2048
      %56 = vsyncadd [#allocation6], %s55
      %s57 = sshll.u32 [#allocation7], 4
      %s58 = int_to_ptr.vmem [resolvable:$true] %s57
      %63 = dma.hbm_to_vmem [thread:$0]  %s2, 2048, %s58, [#allocation6], 128, 128, 8
    $region13: #{tpu_custom_call.1} parent=1 // pred_fallthru
      _
    // Predicated region
    $region14: #{tpu_custom_call.1} parent=1 // pred_check
      _
    $region15: #{tpu_custom_call.1} parent=1 // pred_check_branch
      %65 = sbr.rel (0) target = $region17
    $region16: #{tpu_custom_call.1} parent=1 // pred_region
      _
    $region17: #{tpu_custom_call.1} parent=1 // pred_fallthru
      _
    // Predicated region
    $region18: #{tpu_custom_call.1} parent=1 // pred_check
      _
    $region19: #{tpu_custom_call.1} parent=1 // pred_check_branch
      %67 = sbr.rel (0) target = $region21
    $region20: #{tpu_custom_call.1} parent=1 // pred_region
      %s69 = ssub.s32 1024, 1024
      %70 = vsyncadd [#allocation9], %s69
      %s71 = sshll.u32 [#allocation8], 4
      %s72 = int_to_ptr.vmem [resolvable:$true] %s71
      %77 = dma.hbm_to_vmem [thread:$0]  %s4, 1024, %s72, [#allocation9], 64, 64, 4
    $region21: #{tpu_custom_call.1} parent=1 // pred_fallthru
      _
    // Predicated region
    $region22: #{tpu_custom_call.1} parent=1 // pred_check
      _
    $region23: #{tpu_custom_call.1} parent=1 // pred_check_branch
      %79 = sbr.rel (0) target = $region25
    $region24: #{tpu_custom_call.1} parent=1 // pred_region
      _
    $region25: #{tpu_custom_call.1} parent=1 // pred_fallthru
      _
    // Predicated region
    $region26: #{tpu_custom_call.1} parent=1 // pred_check
      _
    $region27: #{tpu_custom_call.1} parent=1 // pred_check_branch
      %81 = sbr.rel (0) target = $region29
    $region28: #{tpu_custom_call.1} parent=1 // pred_region
      %s83 = ssub.s32 2048, 2048
      %84 = vsyncadd [#allocation9], %s83
      %s85 = sshll.u32 [#allocation10], 4
      %s86 = int_to_ptr.vmem [resolvable:$true] %s85
      %91 = dma.hbm_to_vmem [thread:$0]  %s6, 2048, %s86, [#allocation9], 128, 128, 8
    $region29: #{tpu_custom_call.1} parent=1 // pred_fallthru
      _
    // Predicated region
    $region30: #{tpu_custom_call.1} parent=1 // pred_check
      _
    $region31: #{tpu_custom_call.1} parent=1 // pred_check_branch
      %93 = sbr.rel (0) target = $region33
    $region32: #{tpu_custom_call.1} parent=1 // pred_region
      _
    $region33: #{tpu_custom_call.1} parent=1 // pred_fallthru
      _
    // Predicated region
    $region34: #{tpu_custom_call.1} parent=1 // pred_check
      _
    $region35: #{tpu_custom_call.1} parent=1 // pred_check_branch
      %95 = sbr.rel (0) target = $region37
    $region36: #{tpu_custom_call.1} parent=1 // pred_region
      %s97 = ssub.s32 2048, 2048
      %98 = vsyncadd [#allocation12], %s97
      %s99 = sshll.u32 [#allocation11], 4
      %s100 = int_to_ptr.vmem [resolvable:$true] %s99
      %105 = dma.hbm_to_vmem [thread:$0]  %s8, 2048, %s100, [#allocation12], 128, 128, 8
    $region37: #{tpu_custom_call.1} parent=1 // pred_fallthru
      _
    // Predicated region
    $region38: #{tpu_custom_call.1} parent=1 // pred_check
      _
    $region39: #{tpu_custom_call.1} parent=1 // pred_check_branch
      %107 = sbr.rel (0) target = $region41
    $region40: #{tpu_custom_call.1} parent=1 // pred_region
      _
    $region41: #{tpu_custom_call.1} parent=1 // pred_fallthru
      _
    // Predicated region
    $region42: #{tpu_custom_call.1} parent=1 // pred_check
      _
    $region43: #{tpu_custom_call.1} parent=1 // pred_check_branch
      %109 = sbr.rel (0) target = $region45
    $region44: #{tpu_custom_call.1} parent=1 // pred_region
      %s111 = ssub.s32 1024, 1024
      %112 = vsyncadd [#allocation12], %s111
      %s113 = sshll.u32 [#allocation13], 4
      %s114 = int_to_ptr.vmem [resolvable:$true] %s113
      %119 = dma.hbm_to_vmem [thread:$0]  %s10, 1024, %s114, [#allocation12], 64, 64, 4
    $region45: #{tpu_custom_call.1} parent=1 // pred_fallthru
      _
    // Predicated region
    $region46: #{tpu_custom_call.1} parent=1 // pred_check
      _
    $region47: #{tpu_custom_call.1} parent=1 // pred_check_branch
      %121 = sbr.rel (0) target = $region49
    $region48: #{tpu_custom_call.1} parent=1 // pred_region
      _
    $region49: #{tpu_custom_call.1} parent=1 // pred_fallthru
      _
    // Predicated region
    $region50: #{tpu_custom_call.1} parent=1 // pred_check
      _
    $region51: #{tpu_custom_call.1} parent=1 // pred_check_branch
      %123 = sbr.rel (0) target = $region53
    $region52: #{tpu_custom_call.1} parent=1 // pred_region
      %s125 = ssub.s32 2048, 2048
      %126 = vsyncadd [#allocation15], %s125
      %s127 = sshll.u32 [#allocation14], 4
      %s128 = int_to_ptr.vmem [resolvable:$true] %s127
      %133 = dma.hbm_to_vmem [thread:$0]  %s12, 2048, %s128, [#allocation15], 128, 128, 8
    $region53: #{tpu_custom_call.1} parent=1 // pred_fallthru
      _
    // Predicated region
    $region54: #{tpu_custom_call.1} parent=1 // pred_check
      _
    $region55: #{tpu_custom_call.1} parent=1 // pred_check_branch
      %135 = sbr.rel (0) target = $region57
    $region56: #{tpu_custom_call.1} parent=1 // pred_region
      _
    $region57: #{tpu_custom_call.1} parent=1 // pred_fallthru
      _
    // Predicated region
    $region58: #{tpu_custom_call.1} parent=1 // pred_check
      _
    $region59: #{tpu_custom_call.1} parent=1 // pred_check_branch
      %137 = sbr.rel (0) target = $region61
    $region60: #{tpu_custom_call.1} parent=1 // pred_region
      _
    $region61: #{tpu_custom_call.1} parent=1 // pred_fallthru
      _
    // Predicated region
    $region62: #{tpu_custom_call.1} parent=1 // pred_check
      _
    $region63: #{tpu_custom_call.1} parent=1 // pred_check_branch
      %139 = sbr.rel (0) target = $region65
    $region64: #{tpu_custom_call.1} parent=1 // pred_region
      %s141 = ssub.s32 1024, 1024
      %142 = vsyncadd [#allocation15], %s141
      %s143 = sshll.u32 [#allocation16], 4
      %s144 = int_to_ptr.vmem [resolvable:$true] %s143
      %149 = dma.hbm_to_vmem [thread:$0]  %s15, 1024, %s144, [#allocation15], 64, 64, 4
    $region65: #{tpu_custom_call.1} parent=1 // pred_fallthru
      _
    // Predicated region
    $region66: #{tpu_custom_call.1} parent=1 // pred_check
      _
    $region67: #{tpu_custom_call.1} parent=1 // pred_check_branch
      %151 = sbr.rel (0) target = $region69
    $region68: #{tpu_custom_call.1} parent=1 // pred_region
      _
    $region69: #{tpu_custom_call.1} parent=1 // pred_fallthru
      _
    // Predicated region
    $region70: #{tpu_custom_call.1} parent=1 // pred_check
      _
    $region71: #{tpu_custom_call.1} parent=1 // pred_check_branch
      %153 = sbr.rel (0) target = $region73
    $region72: #{tpu_custom_call.1} parent=1 // pred_region
      %154 = dma.done [#allocation3], 128
    $region73: #{tpu_custom_call.1} parent=1 // pred_fallthru
      _
    // Predicated region
    $region74: #{tpu_custom_call.1} parent=1 // pred_check
      _
    $region75: #{tpu_custom_call.1} parent=1 // pred_check_branch
      %156 = sbr.rel (0) target = $region77
    $region76: #{tpu_custom_call.1} parent=1 // pred_region
      %157 = dma.done [#allocation6], 256
    $region77: #{tpu_custom_call.1} parent=1 // pred_fallthru
      _
    // Predicated region
    $region78: #{tpu_custom_call.1} parent=1 // pred_check
      _
    $region79: #{tpu_custom_call.1} parent=1 // pred_check_branch
      %159 = sbr.rel (0) target = $region81
    $region80: #{tpu_custom_call.1} parent=1 // pred_region
      %160 = dma.done [#allocation6], 2048
    $region81: #{tpu_custom_call.1} parent=1 // pred_fallthru
      _
    // Predicated region
    $region82: #{tpu_custom_call.1} parent=1 // pred_check
      _
    $region83: #{tpu_custom_call.1} parent=1 // pred_check_branch
      %162 = sbr.rel (0) target = $region85
    $region84: #{tpu_custom_call.1} parent=1 // pred_region
      %163 = dma.done [#allocation9], 1024
    $region85: #{tpu_custom_call.1} parent=1 // pred_fallthru
      _
    // Predicated region
    $region86: #{tpu_custom_call.1} parent=1 // pred_check
      _
    $region87: #{tpu_custom_call.1} parent=1 // pred_check_branch
      %165 = sbr.rel (0) target = $region89
    $region88: #{tpu_custom_call.1} parent=1 // pred_region
      %166 = dma.done [#allocation9], 2048
    $region89: #{tpu_custom_call.1} parent=1 // pred_fallthru
      _
    // Predicated region
    $region90: #{tpu_custom_call.1} parent=1 // pred_check
      _
    $region91: #{tpu_custom_call.1} parent=1 // pred_check_branch
      %168 = sbr.rel (0) target = $region93
    $region92: #{tpu_custom_call.1} parent=1 // pred_region
      %169 = dma.done [#allocation12], 2048
    $region93: #{tpu_custom_call.1} parent=1 // pred_fallthru
      _
    // Predicated region
    $region94: #{tpu_custom_call.1} parent=1 // pred_check
      _
    $region95: #{tpu_custom_call.1} parent=1 // pred_check_branch
      %171 = sbr.rel (0) target = $region97
    $region96: #{tpu_custom_call.1} parent=1 // pred_region
      %172 = dma.done [#allocation12], 1024
    $region97: #{tpu_custom_call.1} parent=1 // pred_fallthru
      _
    // Predicated region
    $region98: #{tpu_custom_call.1} parent=1 // pred_check
      _
    $region99: #{tpu_custom_call.1} parent=1 // pred_check_branch
      %174 = sbr.rel (0) target = $region101
    $region100: #{tpu_custom_call.1} parent=1 // pred_region
      %175 = dma.done [#allocation15], 2048
    $region101: #{tpu_custom_call.1} parent=1 // pred_fallthru
      _
    // Predicated region
    $region102: #{tpu_custom_call.1} parent=1 // pred_check
      _
    $region103: #{tpu_custom_call.1} parent=1 // pred_check_branch
      %177 = sbr.rel (0) target = $region105
    $region104: #{tpu_custom_call.1} parent=1 // pred_region
      %178 = dma.done [#allocation15], 1024
    $region105: #{tpu_custom_call.1} parent=1 // pred_fallthru
      _
    %v180 = vld [vmem:[#allocation5] sm:$0xff]
    %v181 = vld [vmem:[#allocation5 + $0x8] sm:$0xff]
    %v182 = vpack.c.bf16 %v181, %v180
    %v183 = vld [vmem:[#allocation7] sm:$0xff]
    %v184 = vld [vmem:[#allocation7 + $0x8] sm:$0xff]
    %v185 = vld [vmem:[#allocation7 + $0x10] sm:$0xff]
    %v186 = vld [vmem:[#allocation7 + $0x18] sm:$0xff]
    %v187 = vld [vmem:[#allocation7 + $0x20] sm:$0xff]
    %v188 = vld [vmem:[#allocation7 + $0x28] sm:$0xff]
    %v189 = vld [vmem:[#allocation7 + $0x30] sm:$0xff]
    %v190 = vld [vmem:[#allocation7 + $0x38] sm:$0xff]
    %v191 = vld [vmem:[#allocation7 + $0x40] sm:$0xff]
    %v192 = vld [vmem:[#allocation7 + $0x48] sm:$0xff]
    %v193 = vld [vmem:[#allocation7 + $0x50] sm:$0xff]
    %v194 = vld [vmem:[#allocation7 + $0x58] sm:$0xff]
    %v195 = vld [vmem:[#allocation7 + $0x60] sm:$0xff]
    %v196 = vld [vmem:[#allocation7 + $0x68] sm:$0xff]
    %v197 = vld [vmem:[#allocation7 + $0x70] sm:$0xff]
    %v198 = vld [vmem:[#allocation7 + $0x78] sm:$0xff]
    %v199 = vld [vmem:[%s3] sm:$0x3]
    %v201 = vlaneseq
    %v202 = vshrl.u32 %v201, 7
    %v203 = vsub.s32 0, %v202
    %v204 = vrot.slane %v199, %v203
    %v205 = vlaneseq
    %v206 = vshrl.u32 %v205, 7
    %v207 = vsub.s32 1, %v206
    %v208 = vrot.slane %v199, %v207
    %v227 = vunpack.c.l.b16 %v183
    %v228 = vunpack.c.h.b16 %v183
    %v229 = vunpack.c.l.b16 %v184
    %v230 = vunpack.c.h.b16 %v184
    %v231 = vunpack.c.l.b16 %v185
    %v232 = vunpack.c.h.b16 %v185
    %v233 = vunpack.c.l.b16 %v186
    %v234 = vunpack.c.h.b16 %v186
    %v235 = vunpack.c.l.b16 %v187
    %v236 = vunpack.c.h.b16 %v187
    %v237 = vunpack.c.l.b16 %v188
    %v238 = vunpack.c.h.b16 %v188
    %v239 = vunpack.c.l.b16 %v189
    %v240 = vunpack.c.h.b16 %v189
    %v241 = vunpack.c.l.b16 %v190
    %v242 = vunpack.c.h.b16 %v190
    %v243 = vunpack.c.l.b16 %v191
    %v244 = vunpack.c.h.b16 %v191
    %v245 = vunpack.c.l.b16 %v192
    %v246 = vunpack.c.h.b16 %v192
    %v247 = vunpack.c.l.b16 %v193
    %v248 = vunpack.c.h.b16 %v193
    %v249 = vunpack.c.l.b16 %v194
    %v250 = vunpack.c.h.b16 %v194
    %v251 = vunpack.c.l.b16 %v195
    %v252 = vunpack.c.h.b16 %v195
    %v253 = vunpack.c.l.b16 %v196
    %v254 = vunpack.c.h.b16 %v196
    %v255 = vunpack.c.l.b16 %v197
    %v256 = vunpack.c.h.b16 %v197
    %v257 = vunpack.c.l.b16 %v198
    %v258 = vunpack.c.h.b16 %v198
    %v259 = vpack.c.b16 %v229, %v227
    %v260 = vpack.c.b16 %v230, %v228
    %v261 = vpack.c.b16 %v233, %v231
    %v262 = vpack.c.b16 %v234, %v232
    %v263 = vpack.c.b16 %v237, %v235
    %v264 = vpack.c.b16 %v238, %v236
    %v265 = vpack.c.b16 %v241, %v239
    %v266 = vpack.c.b16 %v242, %v240
    %v267 = vpack.c.b16 %v245, %v243
    %v268 = vpack.c.b16 %v246, %v244
    %v269 = vpack.c.b16 %v249, %v247
    %v270 = vpack.c.b16 %v250, %v248
    %v271 = vpack.c.b16 %v253, %v251
    %v272 = vpack.c.b16 %v254, %v252
    %v273 = vpack.c.b16 %v257, %v255
    %v274 = vpack.c.b16 %v258, %v256
    %291 = vmatprep.subr.bf16.mxu0 %v260
    %292 = vmatpush1.bf16.msra.mxu0 %v259
    %293 = vmatprep.subr.bf16.mxu0 %v262
    %294 = vmatpush1.bf16.msra.mxu0 %v261
    %295 = vmatprep.subr.bf16.mxu0 %v264
    %296 = vmatpush1.bf16.msra.mxu0 %v263
    %297 = vmatprep.subr.bf16.mxu0 %v266
    %298 = vmatpush1.bf16.msra.mxu0 %v265
    %299 = vmatprep.subr.bf16.mxu0 %v268
    %300 = vmatpush1.bf16.msra.mxu0 %v267
    %301 = vmatprep.subr.bf16.mxu0 %v270
    %302 = vmatpush1.bf16.msra.mxu0 %v269
    %303 = vmatprep.subr.bf16.mxu0 %v272
    %304 = vmatpush1.bf16.msra.mxu0 %v271
    %305 = vmatprep.subr.bf16.mxu0 %v274
    %306 = vmatpush1.bf16.msra.mxu0 %v273
    %307 = vmatprep.subr.bf16.mxu0 0
    %308 = vmatpush1.bf16.msra.mxu0 0
    %309 = vmatprep.subr.bf16.mxu0 0
    %310 = vmatpush1.bf16.msra.mxu0 0
    %311 = vmatprep.subr.bf16.mxu0 0
    %312 = vmatpush1.bf16.msra.mxu0 0
    %313 = vmatprep.subr.bf16.mxu0 0
    %314 = vmatpush1.bf16.msra.mxu0 0
    %315 = vmatprep.subr.bf16.mxu0 0
    %316 = vmatpush1.bf16.msra.mxu0 0
    %317 = vmatprep.subr.bf16.mxu0 0
    %318 = vmatpush1.bf16.msra.mxu0 0
    %319 = vmatprep.subr.bf16.mxu0 0
    %320 = vmatpush1.bf16.msra.mxu0 0
    %321 = vmatprep.subr.bf16.mxu0 0
    %322 = vmatpush1.bf16.msra.mxu0 0
    %323 = vmatprep.mubr.bf16.mxu0 0
    %324 = vmatmul.mubr.bf16.gmra.mrb[0].mxu0 %v182
    %v325 = vpop.f32.mrb[0].mxu0
    %v326 = vadd.f32 %v204, %v325
    %v327 = vpop.f32.mrb[0].mxu0
    %v328 = vadd.f32 %v208, %v327
    %v329 = vpop.f32.mrb[0].mxu0
    %v330 = vadd.f32 %v204, %v329
    %v331 = vpop.f32.mrb[0].mxu0
    %v332 = vadd.f32 %v208, %v331
    %333 = vdwg.mxu0
    %v334 = vxor.u32 %v328, 2147483648
    %v335 = vxor.u32 %v332, 2147483648
    %v336 = vmul.f32 %v334, 1.442695
    %v337 = vpow.pop %v336
    %v338 = vmul.f32 %v335, 1.442695
    %v339 = vpow.pop %v338
    %v340 = vadd.f32 %v337, 1.0
    %v341 = vadd.f32 %v339, 1.0
    %v342 = vrcp.pop %v340
    %v343 = vmul.f32 1.0, %v342
    %v344 = vrcp.pop %v341
    %v345 = vmul.f32 1.0, %v344
    %v346 = vmul.f32 %v326, %v343
    %v347 = vmul.f32 %v330, %v345
    %v348 = vpack.c.bf16 %v347, %v346
    %v349 = vld [vmem:[#allocation8] sm:$0xf]
    %v350 = vld [vmem:[#allocation8 + $0x4] sm:$0xf]
    %v351 = vld [vmem:[#allocation8 + $0x8] sm:$0xf]
    %v352 = vld [vmem:[#allocation8 + $0xc] sm:$0xf]
    %v353 = vld [vmem:[#allocation8 + $0x10] sm:$0xf]
    %v354 = vld [vmem:[#allocation8 + $0x14] sm:$0xf]
    %v355 = vld [vmem:[#allocation8 + $0x18] sm:$0xf]
    %v356 = vld [vmem:[#allocation8 + $0x1c] sm:$0xf]
    %v357 = vld [vmem:[#allocation8 + $0x20] sm:$0xf]
    %v358 = vld [vmem:[#allocation8 + $0x24] sm:$0xf]
    %v359 = vld [vmem:[#allocation8 + $0x28] sm:$0xf]
    %v360 = vld [vmem:[#allocation8 + $0x2c] sm:$0xf]
    %v361 = vld [vmem:[#allocation8 + $0x30] sm:$0xf]
    %v362 = vld [vmem:[#allocation8 + $0x34] sm:$0xf]
    %v363 = vld [vmem:[#allocation8 + $0x38] sm:$0xf]
    %v364 = vld [vmem:[#allocation8 + $0x3c] sm:$0xf]
    %v381 = vunpack.c.l.b16 %v349
    %v382 = vunpack.c.l.b16 %v350
    %v383 = vunpack.c.l.b16 %v351
    %v384 = vunpack.c.l.b16 %v352
    %v385 = vunpack.c.l.b16 %v353
    %v386 = vunpack.c.l.b16 %v354
    %v387 = vunpack.c.l.b16 %v355
    %v388 = vunpack.c.l.b16 %v356
    %v389 = vunpack.c.l.b16 %v357
    %v390 = vunpack.c.l.b16 %v358
    %v391 = vunpack.c.l.b16 %v359
    %v392 = vunpack.c.l.b16 %v360
    %v393 = vunpack.c.l.b16 %v361
    %v394 = vunpack.c.l.b16 %v362
    %v395 = vunpack.c.l.b16 %v363
    %v396 = vunpack.c.l.b16 %v364
    %v397 = vpack.c.b16 %v382, %v381
    %v398 = vpack.c.b16 %v384, %v383
    %v399 = vpack.c.b16 %v386, %v385
    %v400 = vpack.c.b16 %v388, %v387
    %v401 = vpack.c.b16 %v390, %v389
    %v402 = vpack.c.b16 %v392, %v391
    %v403 = vpack.c.b16 %v394, %v393
    %v404 = vpack.c.b16 %v396, %v395
    %413 = vmatprep.subr.bf16.mxu0 0
    %414 = vmatpush1.bf16.msra.mxu0 %v397
    %415 = vmatprep.subr.bf16.mxu0 0
    %416 = vmatpush1.bf16.msra.mxu0 %v398
    %417 = vmatprep.subr.bf16.mxu0 0
    %418 = vmatpush1.bf16.msra.mxu0 %v399
    %419 = vmatprep.subr.bf16.mxu0 0
    %420 = vmatpush1.bf16.msra.mxu0 %v400
    %421 = vmatprep.subr.bf16.mxu0 0
    %422 = vmatpush1.bf16.msra.mxu0 %v401
    %423 = vmatprep.subr.bf16.mxu0 0
    %424 = vmatpush1.bf16.msra.mxu0 %v402
    %425 = vmatprep.subr.bf16.mxu0 0
    %426 = vmatpush1.bf16.msra.mxu0 %v403
    %427 = vmatprep.subr.bf16.mxu0 0
    %428 = vmatpush1.bf16.msra.mxu0 %v404
    %429 = vmatprep.subr.bf16.mxu0 0
    %430 = vmatpush1.bf16.msra.mxu0 0
    %431 = vmatprep.subr.bf16.mxu0 0
    %432 = vmatpush1.bf16.msra.mxu0 0
    %433 = vmatprep.subr.bf16.mxu0 0
    %434 = vmatpush1.bf16.msra.mxu0 0
    %435 = vmatprep.subr.bf16.mxu0 0
    %436 = vmatpush1.bf16.msra.mxu0 0
    %437 = vmatprep.subr.bf16.mxu0 0
    %438 = vmatpush1.bf16.msra.mxu0 0
    %439 = vmatprep.subr.bf16.mxu0 0
    %440 = vmatpush1.bf16.msra.mxu0 0
    %441 = vmatprep.subr.bf16.mxu0 0
    %442 = vmatpush1.bf16.msra.mxu0 0
    %443 = vmatprep.subr.bf16.mxu0 0
    %444 = vmatpush1.bf16.msra.mxu0 0
    %445 = vmatprep.mubr.bf16.mxu0 0
    %446 = vmatmul.mubr.bf16.gmra.mrb[0].mxu0 %v348
    %v447 = vpop.f32.mrb[0].mxu0
    %v448 = vadd.f32 0.0, %v447
    %v449 = vpop.f32.mrb[0].mxu0
    %v450 = vpop.f32.mrb[0].mxu0
    %v451 = vadd.f32 0.0, %v450
    %v452 = vpop.f32.mrb[0].mxu0
    %453 = vdwg.mxu0
    %v454 = vld [vmem:[#allocation2] sm:$0xf]
    %v455 = vld [vmem:[#allocation2 + $0x4] sm:$0xf]
    %v456 = vpack.c.bf16 %v451, %v448
    %v457 = vld [vmem:[%s5] sm:$0x1]
    %v459 = vlaneseq
    %v460 = vshrl.u32 %v459, 7
    %v461 = vsub.s32 0, %v460
    %v462 = vrot.slane %v457, %v461
    %v466 = vunpack.c.l.b16 %v454
    %v467 = vunpack.c.l.b16 %v455
    %v468 = vpack.c.b16 %v467, %v466
    %vm469 = vcmask 130048
    %v471 = vsel %vm469, %v468, 0
    %473 = vmatprep.subr.bf16.mxu0 0
    %474 = vmatpush1.bf16.msra.mxu0 %v456
    %475 = vmatprep.subr.bf16.mxu0 0
    %476 = vmatpush1.bf16.msra.mxu0 0
    %477 = vmatprep.subr.bf16.mxu0 0
    %478 = vmatpush1.bf16.msra.mxu0 0
    %479 = vmatprep.subr.bf16.mxu0 0
    %480 = vmatpush1.bf16.msra.mxu0 0
    %481 = vmatprep.subr.bf16.mxu0 0
    %482 = vmatpush1.bf16.msra.mxu0 0
    %483 = vmatprep.subr.bf16.mxu0 0
    %484 = vmatpush1.bf16.msra.mxu0 0
    %485 = vmatprep.subr.bf16.mxu0 0
    %486 = vmatpush1.bf16.msra.mxu0 0
    %487 = vmatprep.subr.bf16.mxu0 0
    %488 = vmatpush1.bf16.msra.mxu0 0
    %489 = vmatprep.subr.bf16.mxu0 0
    %490 = vmatpush1.bf16.msra.mxu0 0
    %491 = vmatprep.subr.bf16.mxu0 0
    %492 = vmatpush1.bf16.msra.mxu0 0
    %493 = vmatprep.subr.bf16.mxu0 0
    %494 = vmatpush1.bf16.msra.mxu0 0
    %495 = vmatprep.subr.bf16.mxu0 0
    %496 = vmatpush1.bf16.msra.mxu0 0
    %497 = vmatprep.subr.bf16.mxu0 0
    %498 = vmatpush1.bf16.msra.mxu0 0
    %499 = vmatprep.subr.bf16.mxu0 0
    %500 = vmatpush1.bf16.msra.mxu0 0
    %501 = vmatprep.subr.bf16.mxu0 0
    %502 = vmatpush1.bf16.msra.mxu0 0
    %503 = vmatprep.subr.bf16.mxu0 0
    %504 = vmatpush1.bf16.msra.mxu0 0
    %505 = vmatprep.mubr.bf16.mxu0 0
    %506 = vmatmul.mubr.bf16.gmra.mrb[0].mxu0 %v471
    %v507 = vpop.f32.mrb[0].mxu0
    %v508 = vadd.f32 %v462, %v507
    %v509 = vpop.f32.mrb[0].mxu0
    %v510 = vpop.f32.mrb[0].mxu0
    %v511 = vadd.f32 %v462, %v510
    %v512 = vpop.f32.mrb[0].mxu0
    %513 = vdwg.mxu0
    %v514 = vmax.f32 %v508, 0.0
    %v515 = vmax.f32 %v511, 0.0
    %v516 = vpack.c.bf16 %v515, %v514
    %v517 = vld [vmem:[#allocation10] sm:$0xff]
    %v518 = vld [vmem:[#allocation10 + $0x8] sm:$0xff]
    %v519 = vld [vmem:[#allocation10 + $0x10] sm:$0xff]
    %v520 = vld [vmem:[#allocation10 + $0x18] sm:$0xff]
    %v521 = vld [vmem:[#allocation10 + $0x20] sm:$0xff]
    %v522 = vld [vmem:[#allocation10 + $0x28] sm:$0xff]
    %v523 = vld [vmem:[#allocation10 + $0x30] sm:$0xff]
    %v524 = vld [vmem:[#allocation10 + $0x38] sm:$0xff]
    %v525 = vld [vmem:[#allocation10 + $0x40] sm:$0xff]
    %v526 = vld [vmem:[#allocation10 + $0x48] sm:$0xff]
    %v527 = vld [vmem:[#allocation10 + $0x50] sm:$0xff]
    %v528 = vld [vmem:[#allocation10 + $0x58] sm:$0xff]
    %v529 = vld [vmem:[#allocation10 + $0x60] sm:$0xff]
    %v530 = vld [vmem:[#allocation10 + $0x68] sm:$0xff]
    %v531 = vld [vmem:[#allocation10 + $0x70] sm:$0xff]
    %v532 = vld [vmem:[#allocation10 + $0x78] sm:$0xff]
    %v533 = vld [vmem:[%s7] sm:$0x3]
    %v535 = vlaneseq
    %v536 = vshrl.u32 %v535, 7
    %v537 = vsub.s32 0, %v536
    %v538 = vrot.slane %v533, %v537
    %v539 = vlaneseq
    %v540 = vshrl.u32 %v539, 7
    %v541 = vsub.s32 1, %v540
    %v542 = vrot.slane %v533, %v541
    %v561 = vunpack.c.l.b16 %v517
    %v562 = vunpack.c.h.b16 %v517
    %v563 = vunpack.c.l.b16 %v518
    %v564 = vunpack.c.h.b16 %v518
    %v565 = vunpack.c.l.b16 %v519
    %v566 = vunpack.c.h.b16 %v519
    %v567 = vunpack.c.l.b16 %v520
    %v568 = vunpack.c.h.b16 %v520
    %v569 = vunpack.c.l.b16 %v521
    %v570 = vunpack.c.h.b16 %v521
    %v571 = vunpack.c.l.b16 %v522
    %v572 = vunpack.c.h.b16 %v522
    %v573 = vunpack.c.l.b16 %v523
    %v574 = vunpack.c.h.b16 %v523
    %v575 = vunpack.c.l.b16 %v524
    %v576 = vunpack.c.h.b16 %v524
    %v577 = vunpack.c.l.b16 %v525
    %v578 = vunpack.c.h.b16 %v525
    %v579 = vunpack.c.l.b16 %v526
    %v580 = vunpack.c.h.b16 %v526
    %v581 = vunpack.c.l.b16 %v527
    %v582 = vunpack.c.h.b16 %v527
    %v583 = vunpack.c.l.b16 %v528
    %v584 = vunpack.c.h.b16 %v528
    %v585 = vunpack.c.l.b16 %v529
    %v586 = vunpack.c.h.b16 %v529
    %v587 = vunpack.c.l.b16 %v530
    %v588 = vunpack.c.h.b16 %v530
    %v589 = vunpack.c.l.b16 %v531
    %v590 = vunpack.c.h.b16 %v531
    %v591 = vunpack.c.l.b16 %v532
    %v592 = vunpack.c.h.b16 %v532
    %v593 = vpack.c.b16 %v563, %v561
    %v594 = vpack.c.b16 %v564, %v562
    %v595 = vpack.c.b16 %v567, %v565
    %v596 = vpack.c.b16 %v568, %v566
    %v597 = vpack.c.b16 %v571, %v569
    %v598 = vpack.c.b16 %v572, %v570
    %v599 = vpack.c.b16 %v575, %v573
    %v600 = vpack.c.b16 %v576, %v574
    %v601 = vpack.c.b16 %v579, %v577
    %v602 = vpack.c.b16 %v580, %v578
    %v603 = vpack.c.b16 %v583, %v581
    %v604 = vpack.c.b16 %v584, %v582
    %v605 = vpack.c.b16 %v587, %v585
    %v606 = vpack.c.b16 %v588, %v586
    %v607 = vpack.c.b16 %v591, %v589
    %v608 = vpack.c.b16 %v592, %v590
    %625 = vmatprep.subr.bf16.mxu0 %v594
    %626 = vmatpush1.bf16.msra.mxu0 %v593
    %627 = vmatprep.subr.bf16.mxu0 %v596
    %628 = vmatpush1.bf16.msra.mxu0 %v595
    %629 = vmatprep.subr.bf16.mxu0 %v598
    %630 = vmatpush1.bf16.msra.mxu0 %v597
    %631 = vmatprep.subr.bf16.mxu0 %v600
    %632 = vmatpush1.bf16.msra.mxu0 %v599
    %633 = vmatprep.subr.bf16.mxu0 %v602
    %634 = vmatpush1.bf16.msra.mxu0 %v601
    %635 = vmatprep.subr.bf16.mxu0 %v604
    %636 = vmatpush1.bf16.msra.mxu0 %v603
    %637 = vmatprep.subr.bf16.mxu0 %v606
    %638 = vmatpush1.bf16.msra.mxu0 %v605
    %639 = vmatprep.subr.bf16.mxu0 %v608
    %640 = vmatpush1.bf16.msra.mxu0 %v607
    %641 = vmatprep.subr.bf16.mxu0 0
    %642 = vmatpush1.bf16.msra.mxu0 0
    %643 = vmatprep.subr.bf16.mxu0 0
    %644 = vmatpush1.bf16.msra.mxu0 0
    %645 = vmatprep.subr.bf16.mxu0 0
    %646 = vmatpush1.bf16.msra.mxu0 0
    %647 = vmatprep.subr.bf16.mxu0 0
    %648 = vmatpush1.bf16.msra.mxu0 0
    %649 = vmatprep.subr.bf16.mxu0 0
    %650 = vmatpush1.bf16.msra.mxu0 0
    %651 = vmatprep.subr.bf16.mxu0 0
    %652 = vmatpush1.bf16.msra.mxu0 0
    %653 = vmatprep.subr.bf16.mxu0 0
    %654 = vmatpush1.bf16.msra.mxu0 0
    %655 = vmatprep.subr.bf16.mxu0 0
    %656 = vmatpush1.bf16.msra.mxu0 0
    %657 = vmatprep.mubr.bf16.mxu0 0
    %658 = vmatmul.mubr.bf16.gmra.mrb[0].mxu0 %v516
    %v659 = vpop.f32.mrb[0].mxu0
    %v660 = vadd.f32 %v538, %v659
    %v661 = vpop.f32.mrb[0].mxu0
    %v662 = vadd.f32 %v542, %v661
    %v663 = vpop.f32.mrb[0].mxu0
    %v664 = vadd.f32 %v538, %v663
    %v665 = vpop.f32.mrb[0].mxu0
    %v666 = vadd.f32 %v542, %v665
    %667 = vdwg.mxu0
    %v668 = vxor.u32 %v662, 2147483648
    %v669 = vxor.u32 %v666, 2147483648
    %v670 = vmul.f32 %v668, 1.442695
    %v671 = vpow.pop %v670
    %v672 = vmul.f32 %v669, 1.442695
    %v673 = vpow.pop %v672
    %v674 = vadd.f32 %v671, 1.0
    %v675 = vadd.f32 %v673, 1.0
    %v676 = vrcp.pop %v674
    %v677 = vmul.f32 1.0, %v676
    %v678 = vrcp.pop %v675
    %v679 = vmul.f32 1.0, %v678
    %v680 = vmul.f32 %v660, %v677
    %v681 = vmul.f32 %v664, %v679
    %v682 = vpack.c.bf16 %v681, %v680
    %v683 = vld [vmem:[#allocation11] sm:$0xff]
    %v684 = vld [vmem:[#allocation11 + $0x8] sm:$0xff]
    %v685 = vld [vmem:[#allocation11 + $0x10] sm:$0xff]
    %v686 = vld [vmem:[#allocation11 + $0x18] sm:$0xff]
    %v687 = vld [vmem:[#allocation11 + $0x20] sm:$0xff]
    %v688 = vld [vmem:[#allocation11 + $0x28] sm:$0xff]
    %v689 = vld [vmem:[#allocation11 + $0x30] sm:$0xff]
    %v690 = vld [vmem:[#allocation11 + $0x38] sm:$0xff]
    %v691 = vld [vmem:[#allocation11 + $0x40] sm:$0xff]
    %v692 = vld [vmem:[#allocation11 + $0x48] sm:$0xff]
    %v693 = vld [vmem:[#allocation11 + $0x50] sm:$0xff]
    %v694 = vld [vmem:[#allocation11 + $0x58] sm:$0xff]
    %v695 = vld [vmem:[#allocation11 + $0x60] sm:$0xff]
    %v696 = vld [vmem:[#allocation11 + $0x68] sm:$0xff]
    %v697 = vld [vmem:[#allocation11 + $0x70] sm:$0xff]
    %v698 = vld [vmem:[#allocation11 + $0x78] sm:$0xff]
    %v699 = vld [vmem:[%s9] sm:$0x3]
    %v701 = vlaneseq
    %v702 = vshrl.u32 %v701, 7
    %v703 = vsub.s32 0, %v702
    %v704 = vrot.slane %v699, %v703
    %v705 = vlaneseq
    %v706 = vshrl.u32 %v705, 7
    %v707 = vsub.s32 1, %v706
    %v708 = vrot.slane %v699, %v707
    %v727 = vunpack.c.l.b16 %v683
    %v728 = vunpack.c.h.b16 %v683
    %v729 = vunpack.c.l.b16 %v684
    %v730 = vunpack.c.h.b16 %v684
    %v731 = vunpack.c.l.b16 %v685
    %v732 = vunpack.c.h.b16 %v685
    %v733 = vunpack.c.l.b16 %v686
    %v734 = vunpack.c.h.b16 %v686
    %v735 = vunpack.c.l.b16 %v687
    %v736 = vunpack.c.h.b16 %v687
    %v737 = vunpack.c.l.b16 %v688
    %v738 = vunpack.c.h.b16 %v688
    %v739 = vunpack.c.l.b16 %v689
    %v740 = vunpack.c.h.b16 %v689
    %v741 = vunpack.c.l.b16 %v690
    %v742 = vunpack.c.h.b16 %v690
    %v743 = vunpack.c.l.b16 %v691
    %v744 = vunpack.c.h.b16 %v691
    %v745 = vunpack.c.l.b16 %v692
    %v746 = vunpack.c.h.b16 %v692
    %v747 = vunpack.c.l.b16 %v693
    %v748 = vunpack.c.h.b16 %v693
    %v749 = vunpack.c.l.b16 %v694
    %v750 = vunpack.c.h.b16 %v694
    %v751 = vunpack.c.l.b16 %v695
    %v752 = vunpack.c.h.b16 %v695
    %v753 = vunpack.c.l.b16 %v696
    %v754 = vunpack.c.h.b16 %v696
    %v755 = vunpack.c.l.b16 %v697
    %v756 = vunpack.c.h.b16 %v697
    %v757 = vunpack.c.l.b16 %v698
    %v758 = vunpack.c.h.b16 %v698
    %v759 = vpack.c.b16 %v729, %v727
    %v760 = vpack.c.b16 %v730, %v728
    %v761 = vpack.c.b16 %v733, %v731
    %v762 = vpack.c.b16 %v734, %v732
    %v763 = vpack.c.b16 %v737, %v735
    %v764 = vpack.c.b16 %v738, %v736
    %v765 = vpack.c.b16 %v741, %v739
    %v766 = vpack.c.b16 %v742, %v740
    %v767 = vpack.c.b16 %v745, %v743
    %v768 = vpack.c.b16 %v746, %v744
    %v769 = vpack.c.b16 %v749, %v747
    %v770 = vpack.c.b16 %v750, %v748
    %v771 = vpack.c.b16 %v753, %v751
    %v772 = vpack.c.b16 %v754, %v752
    %v773 = vpack.c.b16 %v757, %v755
    %v774 = vpack.c.b16 %v758, %v756
    %791 = vmatprep.subr.bf16.mxu0 %v760
    %792 = vmatpush1.bf16.msra.mxu0 %v759
    %793 = vmatprep.subr.bf16.mxu0 %v762
    %794 = vmatpush1.bf16.msra.mxu0 %v761
    %795 = vmatprep.subr.bf16.mxu0 %v764
    %796 = vmatpush1.bf16.msra.mxu0 %v763
    %797 = vmatprep.subr.bf16.mxu0 %v766
    %798 = vmatpush1.bf16.msra.mxu0 %v765
    %799 = vmatprep.subr.bf16.mxu0 %v768
    %800 = vmatpush1.bf16.msra.mxu0 %v767
    %801 = vmatprep.subr.bf16.mxu0 %v770
    %802 = vmatpush1.bf16.msra.mxu0 %v769
    %803 = vmatprep.subr.bf16.mxu0 %v772
    %804 = vmatpush1.bf16.msra.mxu0 %v771
    %805 = vmatprep.subr.bf16.mxu0 %v774
    %806 = vmatpush1.bf16.msra.mxu0 %v773
    %807 = vmatprep.subr.bf16.mxu0 0
    %808 = vmatpush1.bf16.msra.mxu0 0
    %809 = vmatprep.subr.bf16.mxu0 0
    %810 = vmatpush1.bf16.msra.mxu0 0
    %811 = vmatprep.subr.bf16.mxu0 0
    %812 = vmatpush1.bf16.msra.mxu0 0
    %813 = vmatprep.subr.bf16.mxu0 0
    %814 = vmatpush1.bf16.msra.mxu0 0
    %815 = vmatprep.subr.bf16.mxu0 0
    %816 = vmatpush1.bf16.msra.mxu0 0
    %817 = vmatprep.subr.bf16.mxu0 0
    %818 = vmatpush1.bf16.msra.mxu0 0
    %819 = vmatprep.subr.bf16.mxu0 0
    %820 = vmatpush1.bf16.msra.mxu0 0
    %821 = vmatprep.subr.bf16.mxu0 0
    %822 = vmatpush1.bf16.msra.mxu0 0
    %823 = vmatprep.mubr.bf16.mxu0 0
    %824 = vmatmul.mubr.bf16.gmra.mrb[0].mxu0 %v682
    %v825 = vpop.f32.mrb[0].mxu0
    %v826 = vadd.f32 %v704, %v825
    %v827 = vpop.f32.mrb[0].mxu0
    %v828 = vadd.f32 %v708, %v827
    %v829 = vpop.f32.mrb[0].mxu0
    %v830 = vadd.f32 %v704, %v829
    %v831 = vpop.f32.mrb[0].mxu0
    %v832 = vadd.f32 %v708, %v831
    %833 = vdwg.mxu0
    %v834 = vxor.u32 %v828, 2147483648
    %v835 = vxor.u32 %v832, 2147483648
    %v836 = vmul.f32 %v834, 1.442695
    %v837 = vpow.pop %v836
    %v838 = vmul.f32 %v835, 1.442695
    %v839 = vpow.pop %v838
    %v840 = vadd.f32 %v837, 1.0
    %v841 = vadd.f32 %v839, 1.0
    %v842 = vrcp.pop %v840
    %v843 = vmul.f32 1.0, %v842
    %v844 = vrcp.pop %v841
    %v845 = vmul.f32 1.0, %v844
    %v846 = vmul.f32 %v826, %v843
    %v847 = vmul.f32 %v830, %v845
    %v848 = vpack.c.bf16 %v847, %v846
    %v849 = vld [vmem:[#allocation13] sm:$0xf]
    %v850 = vld [vmem:[#allocation13 + $0x4] sm:$0xf]
    %v851 = vld [vmem:[#allocation13 + $0x8] sm:$0xf]
    %v852 = vld [vmem:[#allocation13 + $0xc] sm:$0xf]
    %v853 = vld [vmem:[#allocation13 + $0x10] sm:$0xf]
    %v854 = vld [vmem:[#allocation13 + $0x14] sm:$0xf]
    %v855 = vld [vmem:[#allocation13 + $0x18] sm:$0xf]
    %v856 = vld [vmem:[#allocation13 + $0x1c] sm:$0xf]
    %v857 = vld [vmem:[#allocation13 + $0x20] sm:$0xf]
    %v858 = vld [vmem:[#allocation13 + $0x24] sm:$0xf]
    %v859 = vld [vmem:[#allocation13 + $0x28] sm:$0xf]
    %v860 = vld [vmem:[#allocation13 + $0x2c] sm:$0xf]
    %v861 = vld [vmem:[#allocation13 + $0x30] sm:$0xf]
    %v862 = vld [vmem:[#allocation13 + $0x34] sm:$0xf]
    %v863 = vld [vmem:[#allocation13 + $0x38] sm:$0xf]
    %v864 = vld [vmem:[#allocation13 + $0x3c] sm:$0xf]
    %v881 = vunpack.c.l.b16 %v849
    %v882 = vunpack.c.l.b16 %v850
    %v883 = vunpack.c.l.b16 %v851
    %v884 = vunpack.c.l.b16 %v852
    %v885 = vunpack.c.l.b16 %v853
    %v886 = vunpack.c.l.b16 %v854
    %v887 = vunpack.c.l.b16 %v855
    %v888 = vunpack.c.l.b16 %v856
    %v889 = vunpack.c.l.b16 %v857
    %v890 = vunpack.c.l.b16 %v858
    %v891 = vunpack.c.l.b16 %v859
    %v892 = vunpack.c.l.b16 %v860
    %v893 = vunpack.c.l.b16 %v861
    %v894 = vunpack.c.l.b16 %v862
    %v895 = vunpack.c.l.b16 %v863
    %v896 = vunpack.c.l.b16 %v864
    %v897 = vpack.c.b16 %v882, %v881
    %v898 = vpack.c.b16 %v884, %v883
    %v899 = vpack.c.b16 %v886, %v885
    %v900 = vpack.c.b16 %v888, %v887
    %v901 = vpack.c.b16 %v890, %v889
    %v902 = vpack.c.b16 %v892, %v891
    %v903 = vpack.c.b16 %v894, %v893
    %v904 = vpack.c.b16 %v896, %v895
    %913 = vmatprep.subr.bf16.mxu0 0
    %914 = vmatpush1.bf16.msra.mxu0 %v897
    %915 = vmatprep.subr.bf16.mxu0 0
    %916 = vmatpush1.bf16.msra.mxu0 %v898
    %917 = vmatprep.subr.bf16.mxu0 0
    %918 = vmatpush1.bf16.msra.mxu0 %v899
    %919 = vmatprep.subr.bf16.mxu0 0
    %920 = vmatpush1.bf16.msra.mxu0 %v900
    %921 = vmatprep.subr.bf16.mxu0 0
    %922 = vmatpush1.bf16.msra.mxu0 %v901
    %923 = vmatprep.subr.bf16.mxu0 0
    %924 = vmatpush1.bf16.msra.mxu0 %v902
    %925 = vmatprep.subr.bf16.mxu0 0
    %926 = vmatpush1.bf16.msra.mxu0 %v903
    %927 = vmatprep.subr.bf16.mxu0 0
    %928 = vmatpush1.bf16.msra.mxu0 %v904
    %929 = vmatprep.subr.bf16.mxu0 0
    %930 = vmatpush1.bf16.msra.mxu0 0
    %931 = vmatprep.subr.bf16.mxu0 0
    %932 = vmatpush1.bf16.msra.mxu0 0
    %933 = vmatprep.subr.bf16.mxu0 0
    %934 = vmatpush1.bf16.msra.mxu0 0
    %935 = vmatprep.subr.bf16.mxu0 0
    %936 = vmatpush1.bf16.msra.mxu0 0
    %937 = vmatprep.subr.bf16.mxu0 0
    %938 = vmatpush1.bf16.msra.mxu0 0
    %939 = vmatprep.subr.bf16.mxu0 0
    %940 = vmatpush1.bf16.msra.mxu0 0
    %941 = vmatprep.subr.bf16.mxu0 0
    %942 = vmatpush1.bf16.msra.mxu0 0
    %943 = vmatprep.subr.bf16.mxu0 0
    %944 = vmatpush1.bf16.msra.mxu0 0
    %945 = vmatprep.mubr.bf16.mxu0 0
    %946 = vmatmul.mubr.bf16.gmra.mrb[0].mxu0 %v848
    %v947 = vpop.f32.mrb[0].mxu0
    %v948 = vadd.f32 0.0, %v947
    %v949 = vpop.f32.mrb[0].mxu0
    %v950 = vpop.f32.mrb[0].mxu0
    %v951 = vadd.f32 0.0, %v950
    %v952 = vpop.f32.mrb[0].mxu0
    %953 = vdwg.mxu0
    %v954 = vpack.c.bf16 %v951, %v948
    %v955 = vld [vmem:[%s11] sm:$0x1]
    %v957 = vlaneseq
    %v958 = vshrl.u32 %v957, 7
    %v959 = vsub.s32 0, %v958
    %v960 = vrot.slane %v955, %v959
    %962 = vmatprep.subr.bf16.mxu0 0
    %963 = vmatpush1.bf16.msra.mxu0 %v954
    %964 = vmatprep.subr.bf16.mxu0 0
    %965 = vmatpush1.bf16.msra.mxu0 0
    %966 = vmatprep.subr.bf16.mxu0 0
    %967 = vmatpush1.bf16.msra.mxu0 0
    %968 = vmatprep.subr.bf16.mxu0 0
    %969 = vmatpush1.bf16.msra.mxu0 0
    %970 = vmatprep.subr.bf16.mxu0 0
    %971 = vmatpush1.bf16.msra.mxu0 0
    %972 = vmatprep.subr.bf16.mxu0 0
    %973 = vmatpush1.bf16.msra.mxu0 0
    %974 = vmatprep.subr.bf16.mxu0 0
    %975 = vmatpush1.bf16.msra.mxu0 0
    %976 = vmatprep.subr.bf16.mxu0 0
    %977 = vmatpush1.bf16.msra.mxu0 0
    %978 = vmatprep.subr.bf16.mxu0 0
    %979 = vmatpush1.bf16.msra.mxu0 0
    %980 = vmatprep.subr.bf16.mxu0 0
    %981 = vmatpush1.bf16.msra.mxu0 0
    %982 = vmatprep.subr.bf16.mxu0 0
    %983 = vmatpush1.bf16.msra.mxu0 0
    %984 = vmatprep.subr.bf16.mxu0 0
    %985 = vmatpush1.bf16.msra.mxu0 0
    %986 = vmatprep.subr.bf16.mxu0 0
    %987 = vmatpush1.bf16.msra.mxu0 0
    %988 = vmatprep.subr.bf16.mxu0 0
    %989 = vmatpush1.bf16.msra.mxu0 0
    %990 = vmatprep.subr.bf16.mxu0 0
    %991 = vmatpush1.bf16.msra.mxu0 0
    %992 = vmatprep.subr.bf16.mxu0 0
    %993 = vmatpush1.bf16.msra.mxu0 0
    %994 = vmatprep.mubr.bf16.mxu0 0
    %995 = vmatmul.mubr.bf16.gmra.mrb[0].mxu0 %v471
    %v996 = vpop.f32.mrb[0].mxu0
    %v997 = vadd.f32 %v960, %v996
    %v998 = vpop.f32.mrb[0].mxu0
    %v999 = vpop.f32.mrb[0].mxu0
    %v1000 = vadd.f32 %v960, %v999
    %v1001 = vpop.f32.mrb[0].mxu0
    %1002 = vdwg.mxu0
    %v1003 = vmax.f32 %v997, 0.0
    %v1004 = vmax.f32 %v1000, 0.0
    %v1005 = vpack.c.bf16 %v1004, %v1003
    %v1006 = vld [vmem:[#allocation14] sm:$0xff]
    %v1007 = vld [vmem:[#allocation14 + $0x8] sm:$0xff]
    %v1008 = vld [vmem:[#allocation14 + $0x10] sm:$0xff]
    %v1009 = vld [vmem:[#allocation14 + $0x18] sm:$0xff]
    %v1010 = vld [vmem:[#allocation14 + $0x20] sm:$0xff]
    %v1011 = vld [vmem:[#allocation14 + $0x28] sm:$0xff]
    %v1012 = vld [vmem:[#allocation14 + $0x30] sm:$0xff]
    %v1013 = vld [vmem:[#allocation14 + $0x38] sm:$0xff]
    %v1014 = vld [vmem:[#allocation14 + $0x40] sm:$0xff]
    %v1015 = vld [vmem:[#allocation14 + $0x48] sm:$0xff]
    %v1016 = vld [vmem:[#allocation14 + $0x50] sm:$0xff]
    %v1017 = vld [vmem:[#allocation14 + $0x58] sm:$0xff]
    %v1018 = vld [vmem:[#allocation14 + $0x60] sm:$0xff]
    %v1019 = vld [vmem:[#allocation14 + $0x68] sm:$0xff]
    %v1020 = vld [vmem:[#allocation14 + $0x70] sm:$0xff]
    %v1021 = vld [vmem:[#allocation14 + $0x78] sm:$0xff]
    %v1022 = vld [vmem:[%s13] sm:$0x3]
    %v1024 = vlaneseq
    %v1025 = vshrl.u32 %v1024, 7
    %v1026 = vsub.s32 0, %v1025
    %v1027 = vrot.slane %v1022, %v1026
    %v1028 = vlaneseq
    %v1029 = vshrl.u32 %v1028, 7
    %v1030 = vsub.s32 1, %v1029
    %v1031 = vrot.slane %v1022, %v1030
    %v1050 = vunpack.c.l.b16 %v1006
    %v1051 = vunpack.c.h.b16 %v1006
    %v1052 = vunpack.c.l.b16 %v1007
    %v1053 = vunpack.c.h.b16 %v1007
    %v1054 = vunpack.c.l.b16 %v1008
    %v1055 = vunpack.c.h.b16 %v1008
    %v1056 = vunpack.c.l.b16 %v1009
    %v1057 = vunpack.c.h.b16 %v1009
    %v1058 = vunpack.c.l.b16 %v1010
    %v1059 = vunpack.c.h.b16 %v1010
    %v1060 = vunpack.c.l.b16 %v1011
    %v1061 = vunpack.c.h.b16 %v1011
    %v1062 = vunpack.c.l.b16 %v1012
    %v1063 = vunpack.c.h.b16 %v1012
    %v1064 = vunpack.c.l.b16 %v1013
    %v1065 = vunpack.c.h.b16 %v1013
    %v1066 = vunpack.c.l.b16 %v1014
    %v1067 = vunpack.c.h.b16 %v1014
    %v1068 = vunpack.c.l.b16 %v1015
    %v1069 = vunpack.c.h.b16 %v1015
    %v1070 = vunpack.c.l.b16 %v1016
    %v1071 = vunpack.c.h.b16 %v1016
    %v1072 = vunpack.c.l.b16 %v1017
    %v1073 = vunpack.c.h.b16 %v1017
    %v1074 = vunpack.c.l.b16 %v1018
    %v1075 = vunpack.c.h.b16 %v1018
    %v1076 = vunpack.c.l.b16 %v1019
    %v1077 = vunpack.c.h.b16 %v1019
    %v1078 = vunpack.c.l.b16 %v1020
    %v1079 = vunpack.c.h.b16 %v1020
    %v1080 = vunpack.c.l.b16 %v1021
    %v1081 = vunpack.c.h.b16 %v1021
    %v1082 = vpack.c.b16 %v1052, %v1050
    %v1083 = vpack.c.b16 %v1053, %v1051
    %v1084 = vpack.c.b16 %v1056, %v1054
    %v1085 = vpack.c.b16 %v1057, %v1055
    %v1086 = vpack.c.b16 %v1060, %v1058
    %v1087 = vpack.c.b16 %v1061, %v1059
    %v1088 = vpack.c.b16 %v1064, %v1062
    %v1089 = vpack.c.b16 %v1065, %v1063
    %v1090 = vpack.c.b16 %v1068, %v1066
    %v1091 = vpack.c.b16 %v1069, %v1067
    %v1092 = vpack.c.b16 %v1072, %v1070
    %v1093 = vpack.c.b16 %v1073, %v1071
    %v1094 = vpack.c.b16 %v1076, %v1074
    %v1095 = vpack.c.b16 %v1077, %v1075
    %v1096 = vpack.c.b16 %v1080, %v1078
    %v1097 = vpack.c.b16 %v1081, %v1079
    %1114 = vmatprep.subr.bf16.mxu0 %v1083
    %1115 = vmatpush1.bf16.msra.mxu0 %v1082
    %1116 = vmatprep.subr.bf16.mxu0 %v1085
    %1117 = vmatpush1.bf16.msra.mxu0 %v1084
    %1118 = vmatprep.subr.bf16.mxu0 %v1087
    %1119 = vmatpush1.bf16.msra.mxu0 %v1086
    %1120 = vmatprep.subr.bf16.mxu0 %v1089
    %1121 = vmatpush1.bf16.msra.mxu0 %v1088
    %1122 = vmatprep.subr.bf16.mxu0 %v1091
    %1123 = vmatpush1.bf16.msra.mxu0 %v1090
    %1124 = vmatprep.subr.bf16.mxu0 %v1093
    %1125 = vmatpush1.bf16.msra.mxu0 %v1092
    %1126 = vmatprep.subr.bf16.mxu0 %v1095
    %1127 = vmatpush1.bf16.msra.mxu0 %v1094
    %1128 = vmatprep.subr.bf16.mxu0 %v1097
    %1129 = vmatpush1.bf16.msra.mxu0 %v1096
    %1130 = vmatprep.subr.bf16.mxu0 0
    %1131 = vmatpush1.bf16.msra.mxu0 0
    %1132 = vmatprep.subr.bf16.mxu0 0
    %1133 = vmatpush1.bf16.msra.mxu0 0
    %1134 = vmatprep.subr.bf16.mxu0 0
    %1135 = vmatpush1.bf16.msra.mxu0 0
    %1136 = vmatprep.subr.bf16.mxu0 0
    %1137 = vmatpush1.bf16.msra.mxu0 0
    %1138 = vmatprep.subr.bf16.mxu0 0
    %1139 = vmatpush1.bf16.msra.mxu0 0
    %1140 = vmatprep.subr.bf16.mxu0 0
    %1141 = vmatpush1.bf16.msra.mxu0 0
    %1142 = vmatprep.subr.bf16.mxu0 0
    %1143 = vmatpush1.bf16.msra.mxu0 0
    %1144 = vmatprep.subr.bf16.mxu0 0
    %1145 = vmatpush1.bf16.msra.mxu0 0
    %1146 = vmatprep.mubr.bf16.mxu0 0
    %1147 = vmatmul.mubr.bf16.gmra.mrb[0].mxu0 %v1005
    %v1148 = vpop.f32.mrb[0].mxu0
    %v1149 = vadd.f32 %v1027, %v1148
    %v1150 = vpop.f32.mrb[0].mxu0
    %v1151 = vadd.f32 %v1031, %v1150
    %v1152 = vpop.f32.mrb[0].mxu0
    %v1153 = vadd.f32 %v1027, %v1152
    %v1154 = vpop.f32.mrb[0].mxu0
    %v1155 = vadd.f32 %v1031, %v1154
    %1156 = vdwg.mxu0
    %v1157 = vxor.u32 %v1151, 2147483648
    %v1158 = vxor.u32 %v1155, 2147483648
    %v1159 = vmul.f32 %v1157, 1.442695
    %v1160 = vpow.pop %v1159
    %v1161 = vmul.f32 %v1158, 1.442695
    %v1162 = vpow.pop %v1161
    %v1163 = vadd.f32 %v1160, 1.0
    %v1164 = vadd.f32 %v1162, 1.0
    %v1165 = vrcp.pop %v1163
    %v1166 = vmul.f32 1.0, %v1165
    %v1167 = vrcp.pop %v1164
    %v1168 = vmul.f32 1.0, %v1167
    %v1169 = vmul.f32 %v1149, %v1166
    %v1170 = vmul.f32 %v1153, %v1168
    %v1171 = vpack.c.bf16 %v1170, %v1169
    %v1172 = vld [vmem:[#allocation16] sm:$0xf]
    %v1173 = vld [vmem:[#allocation16 + $0x4] sm:$0xf]
    %v1174 = vld [vmem:[#allocation16 + $0x8] sm:$0xf]
    %v1175 = vld [vmem:[#allocation16 + $0xc] sm:$0xf]
    %v1176 = vld [vmem:[#allocation16 + $0x10] sm:$0xf]
    %v1177 = vld [vmem:[#allocation16 + $0x14] sm:$0xf]
    %v1178 = vld [vmem:[#allocation16 + $0x18] sm:$0xf]
    %v1179 = vld [vmem:[#allocation16 + $0x1c] sm:$0xf]
    %v1180 = vld [vmem:[#allocation16 + $0x20] sm:$0xf]
    %v1181 = vld [vmem:[#allocation16 + $0x24] sm:$0xf]
    %v1182 = vld [vmem:[#allocation16 + $0x28] sm:$0xf]
    %v1183 = vld [vmem:[#allocation16 + $0x2c] sm:$0xf]
    %v1184 = vld [vmem:[#allocation16 + $0x30] sm:$0xf]
    %v1185 = vld [vmem:[#allocation16 + $0x34] sm:$0xf]
    %v1186 = vld [vmem:[#allocation16 + $0x38] sm:$0xf]
    %v1187 = vld [vmem:[#allocation16 + $0x3c] sm:$0xf]
    %v1204 = vunpack.c.l.b16 %v1172
    %v1205 = vunpack.c.l.b16 %v1173
    %v1206 = vunpack.c.l.b16 %v1174
    %v1207 = vunpack.c.l.b16 %v1175
    %v1208 = vunpack.c.l.b16 %v1176
    %v1209 = vunpack.c.l.b16 %v1177
    %v1210 = vunpack.c.l.b16 %v1178
    %v1211 = vunpack.c.l.b16 %v1179
    %v1212 = vunpack.c.l.b16 %v1180
    %v1213 = vunpack.c.l.b16 %v1181
    %v1214 = vunpack.c.l.b16 %v1182
    %v1215 = vunpack.c.l.b16 %v1183
    %v1216 = vunpack.c.l.b16 %v1184
    %v1217 = vunpack.c.l.b16 %v1185
    %v1218 = vunpack.c.l.b16 %v1186
    %v1219 = vunpack.c.l.b16 %v1187
    %v1220 = vpack.c.b16 %v1205, %v1204
    %v1221 = vpack.c.b16 %v1207, %v1206
    %v1222 = vpack.c.b16 %v1209, %v1208
    %v1223 = vpack.c.b16 %v1211, %v1210
    %v1224 = vpack.c.b16 %v1213, %v1212
    %v1225 = vpack.c.b16 %v1215, %v1214
    %v1226 = vpack.c.b16 %v1217, %v1216
    %v1227 = vpack.c.b16 %v1219, %v1218
    %1236 = vmatprep.subr.bf16.mxu0 0
    %1237 = vmatpush1.bf16.msra.mxu0 %v1220
    %1238 = vmatprep.subr.bf16.mxu0 0
    %1239 = vmatpush1.bf16.msra.mxu0 %v1221
    %1240 = vmatprep.subr.bf16.mxu0 0
    %1241 = vmatpush1.bf16.msra.mxu0 %v1222
    %1242 = vmatprep.subr.bf16.mxu0 0
    %1243 = vmatpush1.bf16.msra.mxu0 %v1223
    %1244 = vmatprep.subr.bf16.mxu0 0
    %1245 = vmatpush1.bf16.msra.mxu0 %v1224
    %1246 = vmatprep.subr.bf16.mxu0 0
    %1247 = vmatpush1.bf16.msra.mxu0 %v1225
    %1248 = vmatprep.subr.bf16.mxu0 0
    %1249 = vmatpush1.bf16.msra.mxu0 %v1226
    %1250 = vmatprep.subr.bf16.mxu0 0
    %1251 = vmatpush1.bf16.msra.mxu0 %v1227
    %1252 = vmatprep.subr.bf16.mxu0 0
    %1253 = vmatpush1.bf16.msra.mxu0 0
    %1254 = vmatprep.subr.bf16.mxu0 0
    %1255 = vmatpush1.bf16.msra.mxu0 0
    %1256 = vmatprep.subr.bf16.mxu0 0
    %1257 = vmatpush1.bf16.msra.mxu0 0
    %1258 = vmatprep.subr.bf16.mxu0 0
    %1259 = vmatpush1.bf16.msra.mxu0 0
    %1260 = vmatprep.subr.bf16.mxu0 0
    %1261 = vmatpush1.bf16.msra.mxu0 0
    %1262 = vmatprep.subr.bf16.mxu0 0
    %1263 = vmatpush1.bf16.msra.mxu0 0
    %1264 = vmatprep.subr.bf16.mxu0 0
    %1265 = vmatpush1.bf16.msra.mxu0 0
    %1266 = vmatprep.subr.bf16.mxu0 0
    %1267 = vmatpush1.bf16.msra.mxu0 0
    %1268 = vmatprep.mubr.bf16.mxu0 0
    %1269 = vmatmul.mubr.bf16.gmra.mrb[0].mxu0 %v1171
    %v1270 = vpop.f32.mrb[0].mxu0
    %v1271 = vadd.f32 0.0, %v1270
    %v1272 = vpop.f32.mrb[0].mxu0
    %v1273 = vpop.f32.mrb[0].mxu0
    %v1274 = vadd.f32 0.0, %v1273
    %v1275 = vpop.f32.mrb[0].mxu0
    %1276 = vdwg.mxu0
    %v1277 = vld [vmem:[%s14] sm:$0xf]
    %v1278 = vpack.c.bf16 %v1274, %v1271
    %v1279 = vld [vmem:[%s16] sm:$0x1]
    %v1281 = vlaneseq
    %v1282 = vshrl.u32 %v1281, 7
    %v1283 = vsub.s32 0, %v1282
    %v1284 = vrot.slane %v1279, %v1283
    %v1287 = vsel %vm469, %v1277, 0
    %1289 = vmatprep.subr.bf16.mxu0 0
    %1290 = vmatpush1.bf16.msra.mxu0 %v1278
    %1291 = vmatprep.subr.bf16.mxu0 0
    %1292 = vmatpush1.bf16.msra.mxu0 0
    %1293 = vmatprep.subr.bf16.mxu0 0
    %1294 = vmatpush1.bf16.msra.mxu0 0
    %1295 = vmatprep.subr.bf16.mxu0 0
    %1296 = vmatpush1.bf16.msra.mxu0 0
    %1297 = vmatprep.subr.bf16.mxu0 0
    %1298 = vmatpush1.bf16.msra.mxu0 0
    %1299 = vmatprep.subr.bf16.mxu0 0
    %1300 = vmatpush1.bf16.msra.mxu0 0
    %1301 = vmatprep.subr.bf16.mxu0 0
    %1302 = vmatpush1.bf16.msra.mxu0 0
    %1303 = vmatprep.subr.bf16.mxu0 0
    %1304 = vmatpush1.bf16.msra.mxu0 0
    %1305 = vmatprep.subr.bf16.mxu0 0
    %1306 = vmatpush1.bf16.msra.mxu0 0
    %1307 = vmatprep.subr.bf16.mxu0 0
    %1308 = vmatpush1.bf16.msra.mxu0 0
    %1309 = vmatprep.subr.bf16.mxu0 0
    %1310 = vmatpush1.bf16.msra.mxu0 0
    %1311 = vmatprep.subr.bf16.mxu0 0
    %1312 = vmatpush1.bf16.msra.mxu0 0
    %1313 = vmatprep.subr.bf16.mxu0 0
    %1314 = vmatpush1.bf16.msra.mxu0 0
    %1315 = vmatprep.subr.bf16.mxu0 0
    %1316 = vmatpush1.bf16.msra.mxu0 0
    %1317 = vmatprep.subr.bf16.mxu0 0
    %1318 = vmatpush1.bf16.msra.mxu0 0
    %1319 = vmatprep.subr.bf16.mxu0 0
    %1320 = vmatpush1.bf16.msra.mxu0 0
    %1321 = vmatprep.mubr.bf16.mxu0 0
    %1322 = vmatmul.mubr.bf16.gmra.mrb[0].mxu0 %v1287
    %v1323 = vpop.f32.mrb[0].mxu0
    %v1324 = vadd.f32 %v1284, %v1323
    %v1325 = vpop.f32.mrb[0].mxu0
    %v1326 = vpop.f32.mrb[0].mxu0
    %v1327 = vpop.f32.mrb[0].mxu0
    %1328 = vdwg.mxu0
    %1329 = vst [vmem:[#allocation17] sm:$0xff] %v1324
    // Predicated region
    $region106: #{tpu_custom_call.1} parent=1 // pred_check
      _
    $region107: #{tpu_custom_call.1} parent=1 // pred_check_branch
      %1331 = sbr.rel (0) target = $region109
    $region108: #{tpu_custom_call.1} parent=1 // pred_region
      %s1333 = ssub.s32 128, 128
      %1334 = vsyncadd [#allocation4], %s1333
      %s1336 = sshll.u32 [#allocation17], 4
      %s1337 = int_to_ptr.vmem [resolvable:$true] %s1336
      %1339 = dma.vmem_to_hbm [thread:$0]  %s1337, 128, %s17, [#allocation4]
    $region109: #{tpu_custom_call.1} parent=1 // pred_fallthru
      _
    // Predicated region
    $region110: #{tpu_custom_call.1} parent=1 // pred_check
      _
    $region111: #{tpu_custom_call.1} parent=1 // pred_check_branch
      %1341 = sbr.rel (0) target = $region113
    $region112: #{tpu_custom_call.1} parent=1 // pred_region
      %1342 = dma.done [#allocation4], 128
    $region113: #{tpu_custom_call.1} parent=1 // pred_fallthru
      _
    %1343 = vsyncpa [#allocation3], 1
    %1344 = vsyncpa [#allocation6], 1
    %1345 = vsyncpa [#allocation9], 1
    %1346 = vsyncpa [#allocation12], 1
    %1347 = vsyncpa [#allocation15], 1
    %1348 = vsyncpa [#allocation4], 1

</llo_original>
